<compile_context>
chip_gen: v7x
topology: tpu7x:2x2x1
jax: 0.10.0
libtpu: 0.0.40
codegen_flags: <defaults>
</compile_context>

<pallas_src>
import functools

import jax
import jax.numpy as jnp
from jax.experimental import pallas as pl
from jax.experimental.pallas import tpu as pltpu


# --------------------------------------------------------------------------------------
# Fused forward kernel (one grid step == one batch element)
# --------------------------------------------------------------------------------------

def _multinet_kernel(audio_ref, lyr_ref,
                     aw0_ref, ab0_ref, aw1_ref, ab1_ref,
                     wtok_ref, lcb_ref, wih_ref, whh_ref, lb_ref,
                     w0_ref, b0_ref, w1_ref, b1_ref,
                     out_ref, *, k1):
    f32 = jnp.float32

    # ------------------------------------------------------------------ static shapes
    T = audio_ref.shape[1]                 # audio frames
    C0 = audio_ref.shape[2]                # NUM_MELS (channels on the lane axis)
    C1 = aw0_ref.shape[1]                  # 32 audio conv channels
    K0 = aw0_ref.shape[0] // C0            # conv0 kernel size (8)
    L1 = T - K0 + 1                        # conv0 output length
    L2 = L1 // 4                           # after MaxPool1d(4)
    L3 = L2 - k1 + 1                       # conv1 output length
    L4 = L3 // 4                           # after MaxPool1d(4)

    Lc = lyr_ref.shape[1]                  # lyrics Conv1d(k=2, s=2) output length
    Lp = Lc // 2                           # after MaxPool1d(2) == LSTM timesteps
    V = wtok_ref.shape[0] // 2             # vocab size
    H = whh_ref.shape[0]                   # LSTM hidden size

    # ------------------------------------------------------------------ audio branch
    x = audio_ref[0]                       # (T, C0), channels-last

    # conv0: in-kernel im2col (static window slices, lane concat) -> one MXU matmul
    patches0 = jnp.concatenate([x[k:k + L1, :] for k in range(K0)], axis=-1)
    y0 = jnp.dot(patches0, aw0_ref[...], preferred_element_type=f32) + ab0_ref[...]

    # MaxPool1d(4): running max over 4 shifted windows (VPU), then pick every 4th row
    # with static contiguous single-row slices (no scratch, no strided reloads).
    m0 = y0[0:L1 - 3, :]
    for j in range(1, 4):
        m0 = jnp.maximum(m0, y0[j:j + L1 - 3, :])
    p0 = jnp.concatenate([m0[4 * s:4 * s + 1, :] for s in range(L2)], axis=0)   # (L2,C1)

    # conv1 + MaxPool1d(4)   (BatchNorm is identity in eval mode -> omitted)
    patches1 = jnp.concatenate([p0[k:k + L3, :] for k in range(k1)], axis=-1)
    y1 = jnp.dot(patches1, aw1_ref[...], preferred_element_type=f32) + ab1_ref[...]

    # pool(4) fused with the time-major flatten: audio_feat = (1, L4*C1)
    groups = []
    for gi in range(L4):
        r = y1[4 * gi:4 * gi + 1, :]
        for j in range(1, 4):
            r = jnp.maximum(r, y1[4 * gi + j:4 * gi + j + 1, :])
        groups.append(r)
    audio_feat = jnp.concatenate(groups, axis=-1)

    # ------------------------------------------------------------------ lyrics branch
    # Embedding lookup + Conv1d(k=2, s=2) fused into ONE one-hot matmul against the
    # precomputed token table wtok = [embed @ Wc_k0 ; embed @ Wc_k1]  (2V, 16).
    ids = lyr_ref[0]                       # (Lc, 2) int32: tokens (2t, 2t+1)
    ide = ids[:, 0:1]
    ido = ids[:, 1:2]
    col = jax.lax.broadcasted_iota(jnp.int32, (Lc, 2 * V), 1)
    onehot = jnp.where(col < V,
                       (col == ide).astype(f32),
                       ((col - V) == ido).astype(f32))
    yl = jnp.dot(onehot, wtok_ref[...], preferred_element_type=f32) + lcb_ref[...]
    yl = jnp.maximum(yl, 0.0)              # ReLU, (Lc, 16)

    # MaxPool1d(2): pairwise maxes on value slices
    lp = jnp.concatenate(
        [jnp.maximum(yl[2 * t:2 * t + 1, :], yl[2 * t + 1:2 * t + 2, :])
         for t in range(Lp)], axis=0)      # (Lp, 16)

    # LSTM(16 -> H), zero initial state.  Input projection hoisted out of recurrence.
    xp = jnp.dot(lp, wih_ref[...], preferred_element_type=f32) + lb_ref[...]   # (Lp,4H)
    whh = whh_ref[...]                     # hoisted out of the unrolled loop
    lane = jax.lax.broadcasted_iota(jnp.int32, (1, 4 * H), 1)
    cell_mask = (lane >= 2 * H) & (lane < 3 * H)        # PyTorch gate order: i, f, g, o
    h = jnp.zeros((1, H), f32)
    c = jnp.zeros((1, H), f32)
    hs = []
    for t in range(Lp):                    # statically unrolled (Lp == 4)
        g = xp[t:t + 1, :] + jnp.dot(h, whh, preferred_element_type=f32)
        sg = jax.nn.sigmoid(g)             # single EUP pass over the full 4H width
        # cell-gate columns were pre-scaled by 2  =>  tanh(x) = 2*sigmoid(2x) - 1
        act = jnp.where(cell_mask, 2.0 * sg - 1.0, sg)
        i_g = act[:, 0:H]
        f_g = act[:, H:2 * H]
        g_g = act[:, 2 * H:3 * H]
        o_g = act[:, 3 * H:4 * H]
        c = f_g * c + i_g * g_g
        h = o_g * jnp.tanh(c)
        hs.append(h)
    lyrics_feat = jnp.concatenate(hs, axis=-1)          # (1, Lp*H), time-major

    # ------------------------------------------------------------ fusion classifier
    # concat is a lane concat; the two partial matmuls are merged (w0 pre-stacked).
    feat = jnp.concatenate([audio_feat, lyrics_feat], axis=-1)   # (1, L4*C1 + Lp*H)
    h1 = jnp.dot(feat, w0_ref[...], preferred_element_type=f32) + b0_ref[...]
    h1 = jnp.clip(h1, -0.5, 0.5)           # Hardtanh(-0.5, 0.5); Dropout = identity
    score = jnp.dot(h1, w1_ref[...], preferred_element_type=f32) + b1_ref[...]
    out_ref[0] = score


def multinet_forward(kernel_params, audio, lyrics):
    """audio: (B, T, NUM_MELS) float; lyrics: (B, SEQ) int32 token ids."""
    kp = kernel_params
    B, T, C0 = audio.shape
    SEQ = lyrics.shape[1]
    Lc = (SEQ - 2) // 2 + 1                # Conv1d(k=2, s=2) output length

    C1 = kp["aw0"].shape[1]
    # The reference's AudioNet.conv1 is declared Conv1d(NUM_MELS, 32, 8) but is fed a
    # 32-channel input; the module is only shape-consistent when NUM_MELS == 32.
    assert C0 == C1, "AudioNet.conv1 requires NUM_MELS == 32"
    K1 = kp["aw1"].shape[0] // C1
    num_output = kp["b1"].shape[1]

    audio_f = audio.astype(jnp.float32)
    lyr = lyrics[:, :2 * Lc].reshape(B, Lc, 2).astype(jnp.int32)   # token pairs (2t,2t+1)

    weights = (kp["aw0"], kp["ab0"], kp["aw1"], kp["ab1"],
               kp["wtok"], kp["lcb"], kp["wih"], kp["whh"], kp["lb"],
               kp["w0"], kp["b0"], kp["w1"], kp["b1"])

    def batch_spec(shape):
        nd = len(shape)
        return pl.BlockSpec((1,) + tuple(shape[1:]), lambda b, _n=nd: (b,) + (0,) * (_n - 1))

    def const_spec(shape):
        nd = len(shape)
        return pl.BlockSpec(tuple(shape), lambda b, _n=nd: (0,) * _n)

    out = pl.pallas_call(
        functools.partial(_multinet_kernel, k1=K1),
        out_shape=jax.ShapeDtypeStruct((B, 1, num_output), jnp.float32),
        grid=(B,),
        in_specs=[batch_spec(audio_f.shape), batch_spec(lyr.shape)]
                 + [const_spec(w.shape) for w in weights],
        out_specs=pl.BlockSpec((1, 1, num_output), lambda b: (b, 0, 0)),
        compiler_params=pltpu.CompilerParams(
            dimension_semantics=("parallel",),      # batch axis: both TCs on v7x
        ),
    )(audio_f, lyr, *weights)
    return out.reshape(B, num_output)


# --------------------------------------------------------------------------------------
# Parameters: PyTorch-layout construction + conversion to kernel layout
# --------------------------------------------------------------------------------------

def _uniform(key, shape, scale):
    return jax.random.uniform(key, shape, jnp.float32, -scale, scale)


def make_params(key, *, num_mels, vocab, embd, seq, hid, num_output, t_audio):
    """Parameters in PyTorch layouts (Conv1d: (Cout,Cin,K); Linear: (out,in); LSTM: (4H,·))."""
    ks = jax.random.split(key, 14)
    L1 = t_audio - 8 + 1
    L2 = L1 // 4
    L3 = L2 - 8 + 1
    L4 = L3 // 4
    audio_flat = 32 * L4
    lyrics_flat = hid * ((seq // 2) // 2)
    fused = audio_flat + lyrics_flat

    return {
        # AudioNet
        "a_conv0_w": _uniform(ks[0], (32, num_mels, 8), 0.08),
        "a_conv0_b": _uniform(ks[1], (32,), 0.05),
        "a_conv1_w": _uniform(ks[2], (32, num_mels, 8), 0.08),  # reference uses NUM_MELS in-channels
        "a_conv1_b": _uniform(ks[3], (32,), 0.05),
        # LyricsNet
        "l_embed":   _uniform(ks[4], (vocab, embd), 0.5),
        "l_conv0_w": _uniform(ks[5], (16, embd, 2), 0.25),
        "l_conv0_b": _uniform(ks[6], (16,), 0.1),
        "l_w_ih":    _uniform(ks[7], (4 * hid, 16), 0.25),
        "l_w_hh":    _uniform(ks[8], (4 * hid, hid), 0.25),
        "l_b_ih":    _uniform(ks[9], (4 * hid,), 0.1),
        "l_b_hh":    _uniform(ks[10], (4 * hid,), 0.1),
        # MultiNet fusion classifier: Linear(fused,100) -> Hardtanh(-.5,.5) -> Linear(100,out)
        "c_w0": _uniform(ks[11], (100, fused), 0.1),
        "c_b0": jnp.zeros((100,), jnp.float32),
        "c_w1": _uniform(ks[12], (num_output, 100), 0.1),
        "c_b1": jnp.zeros((num_output,), jnp.float32),
    }


def prepare_params(p, *, t_audio, seq, hid):
    """Convert PyTorch-layout params to the lane-friendly layouts the fused kernel wants."""
    f32 = jnp.float32
    num_mels = p["a_conv0_w"].shape[1]
    cin1 = p["a_conv1_w"].shape[1]
    K0 = p["a_conv0_w"].shape[2]
    K1 = p["a_conv1_w"].shape[2]
    C1 = p["a_conv0_w"].shape[0]
    L1 = t_audio - K0 + 1
    L2 = L1 // 4
    L3 = L2 - K1 + 1
    L4 = L3 // 4
    audio_flat = C1 * L4
    Lp = ((seq - 2) // 2 + 1) // 2
    H = hid

    # Fusion weight: PyTorch channel-/h-major flatten -> kernel time-major flatten,
    # and the concat seam is folded by stacking the two halves on the K axis.
    c_w0 = p["c_w0"].astype(f32)
    w0a = (c_w0[:, :audio_flat].reshape(-1, C1, L4)
           .transpose(2, 1, 0).reshape(L4 * C1, -1))
    w0b = (c_w0[:, audio_flat:].reshape(-1, H, Lp)
           .transpose(2, 1, 0).reshape(Lp * H, -1))
    w0 = jnp.concatenate([w0a, w0b], axis=0)                       # (L4*C1 + Lp*H, 100)

    # Embedding folded into the lyrics conv: token table (2*VOCAB, 16).
    emb = p["l_embed"].astype(f32)
    wc = p["l_conv0_w"].astype(f32)                                # (16, EMBD, K=2)
    wtok = jnp.concatenate(
        [jnp.dot(emb, wc[:, :, 0].T, precision="highest"),
         jnp.dot(emb, wc[:, :, 1].T, precision="highest")], axis=0)

    # LSTM: gates (4H) on lanes, b_ih + b_hh pre-summed, cell-gate columns pre-scaled
    # by 2 so the kernel recovers tanh from a single sigmoid pass.
    gate_scale = jnp.ones((4 * hid,), f32).at[2 * hid:3 * hid].set(2.0)
    wih = p["l_w_ih"].astype(f32).T * gate_scale                   # (16, 4H)
    whh = p["l_w_hh"].astype(f32).T * gate_scale                   # (H, 4H)
    lb = ((p["l_b_ih"] + p["l_b_hh"]).astype(f32) * gate_scale).reshape(1, 4 * hid)

    return {
        # conv weights -> im2col layout: row index = k*Cin + cin, out-channels on lanes
        "aw0": p["a_conv0_w"].astype(f32).transpose(2, 1, 0).reshape(K0 * num_mels, C1),
        "ab0": p["a_conv0_b"].astype(f32).reshape(1, C1),
        "aw1": p["a_conv1_w"].astype(f32).transpose(2, 1, 0).reshape(K1 * cin1, C1),
        "ab1": p["a_conv1_b"].astype(f32).reshape(1, C1),
        "wtok": wtok,
        "lcb": p["l_conv0_b"].astype(f32).reshape(1, -1),
        "wih": wih, "whh": whh, "lb": lb,
        "w0": w0,
        "b0": p["c_b0"].astype(f32).reshape(1, -1),
        "w1": p["c_w1"].astype(f32).T,                             # (100, num_output)
        "b1": p["c_b1"].astype(f32).reshape(1, -1),
    }


# --------------------------------------------------------------------------------------
# Pure-JAX reference (PyTorch layouts / orderings) for a numerical cross-check
# --------------------------------------------------------------------------------------

def ref_forward(p, audio, lyrics, *, hid):
    f32 = jnp.float32

    def conv1d_nwc(x, w, b, stride):
        Cout, Cin, K = w.shape
        Lout = (x.shape[1] - K) // stride + 1
        win = jnp.stack([x[:, t * stride: t * stride + K, :] for t in range(Lout)],
                        axis=1)                                    # (B, Lout, K, Cin)
        return (jnp.einsum('btkc,ock->bto', win, w.astype(f32), precision="highest")
                + b.astype(f32))

    def maxpool_nwc(x, k):
        Bn, L, Cn = x.shape
        L2 = L // k
        return jnp.max(x[:, :L2 * k, :].reshape(Bn, L2, k, Cn), axis=2)

    B = audio.shape[0]
    a = conv1d_nwc(audio.astype(f32), p["a_conv0_w"], p["a_conv0_b"], 1)
    a = maxpool_nwc(a, 4)
    a = conv1d_nwc(a, p["a_conv1_w"], p["a_conv1_b"], 1)
    a = maxpool_nwc(a, 4)
    audio_flat = jnp.transpose(a, (0, 2, 1)).reshape(B, -1)        # channel-major flatten

    emb = jnp.take(p["l_embed"].astype(f32), lyrics, axis=0)
    y = jnp.maximum(conv1d_nwc(emb, p["l_conv0_w"], p["l_conv0_b"], 2), 0.0)
    y = maxpool_nwc(y, 2)                                          # (B, Lp, 16)

    H = hid
    wih, whh = p["l_w_ih"].astype(f32), p["l_w_hh"].astype(f32)
    bias = (p["l_b_ih"] + p["l_b_hh"]).astype(f32)
    h = jnp.zeros((B, H), f32)
    c = jnp.zeros((B, H), f32)
    outs = []
    for t in range(y.shape[1]):
        g = (jnp.dot(y[:, t, :], wih.T, precision="highest")
             + jnp.dot(h, whh.T, precision="highest") + bias)
        i_g = jax.nn.sigmoid(g[:, 0:H]);      f_g = jax.nn.sigmoid(g[:, H:2 * H])
        g_g = jnp.tanh(g[:, 2 * H:3 * H]);    o_g = jax.nn.sigmoid(g[:, 3 * H:4 * H])
        c = f_g * c + i_g * g_g
        h = o_g * jnp.tanh(c)
        outs.append(h)
    lstm_out = jnp.stack(outs, axis=0)                             # (T, B, H)
    lyrics_flat = jnp.transpose(lstm_out, (1, 2, 0)).reshape(B, -1)  # h-major flatten

    concat = jnp.concatenate([audio_flat, lyrics_flat], axis=1)
    h1 = jnp.clip(jnp.dot(concat, p["c_w0"].astype(f32).T, precision="highest")
                  + p["c_b0"].astype(f32), -0.5, 0.5)
    return (jnp.dot(h1, p["c_w1"].astype(f32).T, precision="highest")
            + p["c_b1"].astype(f32))


# --------------------------------------------------------------------------------------
if __name__ == "__main__":
    B = 2
    NUM_MELS = 32        # config.NUM_MELS (32 so conv1's in-channels line up)
    T_AUDIO = 67         # audio frames
    SEQ = 16             # lyrics sequence length
    VOCAB = 50
    EMBD = 8             # config.EMBD_DIM
    HID = 8              # config.LSTM_LATENT_DIM
    NUM_OUTPUT = 4       # config.LABEL_NAME == 'Label_kMean_4'

    key = jax.random.PRNGKey(0)
    k_params, k_audio, k_lyrics = jax.random.split(key, 3)

    torch_params = make_params(k_params, num_mels=NUM_MELS, vocab=VOCAB, embd=EMBD,
                               seq=SEQ, hid=HID, num_output=NUM_OUTPUT, t_audio=T_AUDIO)
    kparams = prepare_params(torch_params, t_audio=T_AUDIO, seq=SEQ, hid=HID)

    audio = jax.random.normal(k_audio, (B, T_AUDIO, NUM_MELS), jnp.float32)
    lyrics = jax.random.randint(k_lyrics, (B, SEQ), 0, VOCAB, jnp.int32)

    fwd = jax.jit(multinet_forward)
    score = jax.block_until_ready(fwd(kparams, audio, lyrics))

    assert score.shape == (B, NUM_OUTPUT), score.shape
    assert bool(jnp.all(jnp.isfinite(score)))

    ref = jax.block_until_ready(ref_forward(torch_params, audio, lyrics, hid=HID))
    assert jnp.allclose(score, ref, rtol=2e-3, atol=2e-3), (score, ref)

    print("KERNEL_OK")
</pallas_src>

<mosaic_0001>
module attributes {stable_mosaic.version = 11 : i64} {
  func.func @_multinet_kernel(%arg0: i32, %arg1: memref<1x67x32xf32, #tpu.memory_space<vmem>>, %arg2: memref<1x8x2xi32, #tpu.memory_space<vmem>>, %arg3: memref<256x32xf32, #tpu.memory_space<vmem>>, %arg4: memref<1x32xf32, #tpu.memory_space<vmem>>, %arg5: memref<256x32xf32, #tpu.memory_space<vmem>>, %arg6: memref<1x32xf32, #tpu.memory_space<vmem>>, %arg7: memref<100x16xf32, #tpu.memory_space<vmem>>, %arg8: memref<1x16xf32, #tpu.memory_space<vmem>>, %arg9: memref<16x32xf32, #tpu.memory_space<vmem>>, %arg10: memref<8x32xf32, #tpu.memory_space<vmem>>, %arg11: memref<1x32xf32, #tpu.memory_space<vmem>>, %arg12: memref<96x100xf32, #tpu.memory_space<vmem>>, %arg13: memref<1x100xf32, #tpu.memory_space<vmem>>, %arg14: memref<100x4xf32, #tpu.memory_space<vmem>>, %arg15: memref<1x4xf32, #tpu.memory_space<vmem>>, %arg16: memref<1x1x4xf32, #tpu.memory_space<vmem>>) attributes {dimension_semantics = [#tpu.dimension_semantics<parallel>], iteration_bounds = array<i64: 2>, scalar_prefetch = 0 : i64, scratch_operands = 0 : i64, tpu.core_type = #tpu.core_type<tc>, window_params = [{transform_indices = @transform_0, window_bounds = array<i64: 1, 67, 32>}, {transform_indices = @transform_1, window_bounds = array<i64: 1, 8, 2>}, {pipeline_mode = #tpu.pipeline_mode<synchronous>, transform_indices = @transform_2, window_bounds = array<i64: 256, 32>}, {pipeline_mode = #tpu.pipeline_mode<synchronous>, transform_indices = @transform_3, window_bounds = array<i64: 1, 32>}, {pipeline_mode = #tpu.pipeline_mode<synchronous>, transform_indices = @transform_4, window_bounds = array<i64: 256, 32>}, {pipeline_mode = #tpu.pipeline_mode<synchronous>, transform_indices = @transform_5, window_bounds = array<i64: 1, 32>}, {pipeline_mode = #tpu.pipeline_mode<synchronous>, transform_indices = @transform_6, window_bounds = array<i64: 100, 16>}, {pipeline_mode = #tpu.pipeline_mode<synchronous>, transform_indices = @transform_7, window_bounds = array<i64: 1, 16>}, {pipeline_mode = #tpu.pipeline_mode<synchronous>, transform_indices = @transform_8, window_bounds = array<i64: 16, 32>}, {pipeline_mode = #tpu.pipeline_mode<synchronous>, transform_indices = @transform_9, window_bounds = array<i64: 8, 32>}, {pipeline_mode = #tpu.pipeline_mode<synchronous>, transform_indices = @transform_10, window_bounds = array<i64: 1, 32>}, {pipeline_mode = #tpu.pipeline_mode<synchronous>, transform_indices = @transform_11, window_bounds = array<i64: 96, 100>}, {pipeline_mode = #tpu.pipeline_mode<synchronous>, transform_indices = @transform_12, window_bounds = array<i64: 1, 100>}, {pipeline_mode = #tpu.pipeline_mode<synchronous>, transform_indices = @transform_13, window_bounds = array<i64: 100, 4>}, {pipeline_mode = #tpu.pipeline_mode<synchronous>, transform_indices = @transform_14, window_bounds = array<i64: 1, 4>}, {transform_indices = @transform_15, window_bounds = array<i64: 1, 1, 4>}]} {
    %c0 = arith.constant 0 : index
    %c0_0 = arith.constant 0 : index
    %c0_1 = arith.constant 0 : index
    %0 = vector.load %arg1[%c0, %c0_0, %c0_1] : memref<1x67x32xf32, #tpu.memory_space<vmem>>, vector<1x67x32xf32>
    %1 = vector.shape_cast %0 : vector<1x67x32xf32> to vector<67x32xf32>
    %2 = vector.extract_strided_slice %1 {offsets = [0, 0], sizes = [60, 32], strides = [1, 1]} : vector<67x32xf32> to vector<60x32xf32>
    %3 = vector.extract_strided_slice %1 {offsets = [1, 0], sizes = [60, 32], strides = [1, 1]} : vector<67x32xf32> to vector<60x32xf32>
    %4 = vector.extract_strided_slice %1 {offsets = [2, 0], sizes = [60, 32], strides = [1, 1]} : vector<67x32xf32> to vector<60x32xf32>
    %5 = vector.extract_strided_slice %1 {offsets = [3, 0], sizes = [60, 32], strides = [1, 1]} : vector<67x32xf32> to vector<60x32xf32>
    %6 = vector.extract_strided_slice %1 {offsets = [4, 0], sizes = [60, 32], strides = [1, 1]} : vector<67x32xf32> to vector<60x32xf32>
    %7 = vector.extract_strided_slice %1 {offsets = [5, 0], sizes = [60, 32], strides = [1, 1]} : vector<67x32xf32> to vector<60x32xf32>
    %8 = vector.extract_strided_slice %1 {offsets = [6, 0], sizes = [60, 32], strides = [1, 1]} : vector<67x32xf32> to vector<60x32xf32>
    %9 = vector.extract_strided_slice %1 {offsets = [7, 0], sizes = [60, 32], strides = [1, 1]} : vector<67x32xf32> to vector<60x32xf32>
    %10 = tpu.concatenate %2, %3, %4, %5, %6, %7, %8, %9 in 1 : vector<60x32xf32>, vector<60x32xf32>, vector<60x32xf32>, vector<60x32xf32>, vector<60x32xf32>, vector<60x32xf32>, vector<60x32xf32>, vector<60x32xf32> -> vector<60x256xf32>
    %c0_2 = arith.constant 0 : index
    %c0_3 = arith.constant 0 : index
    %11 = vector.load %arg3[%c0_2, %c0_3] : memref<256x32xf32, #tpu.memory_space<vmem>>, vector<256x32xf32>
    %cst = arith.constant dense<0.000000e+00> : vector<60x32xf32>
    %12 = tpu.matmul %10, %11, %cst {dimension_numbers = #tpu.dot_dimension_numbers<[1], [0], [0], [1], [0, 0, 1, 1], [], []>} : vector<60x256xf32>, vector<256x32xf32>, vector<60x32xf32> -> vector<60x32xf32>
    %c0_4 = arith.constant 0 : index
    %c0_5 = arith.constant 0 : index
    %13 = vector.load %arg4[%c0_4, %c0_5] : memref<1x32xf32, #tpu.memory_space<vmem>>, vector<1x32xf32>
    %14 = vector.broadcast %13 : vector<1x32xf32> to vector<60x32xf32>
    %15 = arith.addf %12, %14 : vector<60x32xf32>
    %16 = vector.extract_strided_slice %15 {offsets = [0, 0], sizes = [57, 32], strides = [1, 1]} : vector<60x32xf32> to vector<57x32xf32>
    %17 = vector.extract_strided_slice %15 {offsets = [1, 0], sizes = [57, 32], strides = [1, 1]} : vector<60x32xf32> to vector<57x32xf32>
    %18 = arith.maximumf %16, %17 : vector<57x32xf32>
    %19 = vector.extract_strided_slice %15 {offsets = [2, 0], sizes = [57, 32], strides = [1, 1]} : vector<60x32xf32> to vector<57x32xf32>
    %20 = arith.maximumf %18, %19 : vector<57x32xf32>
    %21 = vector.extract_strided_slice %15 {offsets = [3, 0], sizes = [57, 32], strides = [1, 1]} : vector<60x32xf32> to vector<57x32xf32>
    %22 = arith.maximumf %20, %21 : vector<57x32xf32>
    %23 = vector.extract_strided_slice %22 {offsets = [0, 0], sizes = [1, 32], strides = [1, 1]} : vector<57x32xf32> to vector<1x32xf32>
    %24 = vector.extract_strided_slice %22 {offsets = [4, 0], sizes = [1, 32], strides = [1, 1]} : vector<57x32xf32> to vector<1x32xf32>
    %25 = vector.extract_strided_slice %22 {offsets = [8, 0], sizes = [1, 32], strides = [1, 1]} : vector<57x32xf32> to vector<1x32xf32>
    %26 = vector.extract_strided_slice %22 {offsets = [12, 0], sizes = [1, 32], strides = [1, 1]} : vector<57x32xf32> to vector<1x32xf32>
    %27 = vector.extract_strided_slice %22 {offsets = [16, 0], sizes = [1, 32], strides = [1, 1]} : vector<57x32xf32> to vector<1x32xf32>
    %28 = vector.extract_strided_slice %22 {offsets = [20, 0], sizes = [1, 32], strides = [1, 1]} : vector<57x32xf32> to vector<1x32xf32>
    %29 = vector.extract_strided_slice %22 {offsets = [24, 0], sizes = [1, 32], strides = [1, 1]} : vector<57x32xf32> to vector<1x32xf32>
    %30 = vector.extract_strided_slice %22 {offsets = [28, 0], sizes = [1, 32], strides = [1, 1]} : vector<57x32xf32> to vector<1x32xf32>
    %31 = vector.extract_strided_slice %22 {offsets = [32, 0], sizes = [1, 32], strides = [1, 1]} : vector<57x32xf32> to vector<1x32xf32>
    %32 = vector.extract_strided_slice %22 {offsets = [36, 0], sizes = [1, 32], strides = [1, 1]} : vector<57x32xf32> to vector<1x32xf32>
    %33 = vector.extract_strided_slice %22 {offsets = [40, 0], sizes = [1, 32], strides = [1, 1]} : vector<57x32xf32> to vector<1x32xf32>
    %34 = vector.extract_strided_slice %22 {offsets = [44, 0], sizes = [1, 32], strides = [1, 1]} : vector<57x32xf32> to vector<1x32xf32>
    %35 = vector.extract_strided_slice %22 {offsets = [48, 0], sizes = [1, 32], strides = [1, 1]} : vector<57x32xf32> to vector<1x32xf32>
    %36 = vector.extract_strided_slice %22 {offsets = [52, 0], sizes = [1, 32], strides = [1, 1]} : vector<57x32xf32> to vector<1x32xf32>
    %37 = vector.extract_strided_slice %22 {offsets = [56, 0], sizes = [1, 32], strides = [1, 1]} : vector<57x32xf32> to vector<1x32xf32>
    %38 = tpu.concatenate %23, %24, %25, %26, %27, %28, %29, %30, %31, %32, %33, %34, %35, %36, %37 in 0 : vector<1x32xf32>, vector<1x32xf32>, vector<1x32xf32>, vector<1x32xf32>, vector<1x32xf32>, vector<1x32xf32>, vector<1x32xf32>, vector<1x32xf32>, vector<1x32xf32>, vector<1x32xf32>, vector<1x32xf32>, vector<1x32xf32>, vector<1x32xf32>, vector<1x32xf32>, vector<1x32xf32> -> vector<15x32xf32>
    %39 = vector.extract_strided_slice %38 {offsets = [0, 0], sizes = [8, 32], strides = [1, 1]} : vector<15x32xf32> to vector<8x32xf32>
    %40 = vector.extract_strided_slice %38 {offsets = [1, 0], sizes = [8, 32], strides = [1, 1]} : vector<15x32xf32> to vector<8x32xf32>
    %41 = vector.extract_strided_slice %38 {offsets = [2, 0], sizes = [8, 32], strides = [1, 1]} : vector<15x32xf32> to vector<8x32xf32>
    %42 = vector.extract_strided_slice %38 {offsets = [3, 0], sizes = [8, 32], strides = [1, 1]} : vector<15x32xf32> to vector<8x32xf32>
    %43 = vector.extract_strided_slice %38 {offsets = [4, 0], sizes = [8, 32], strides = [1, 1]} : vector<15x32xf32> to vector<8x32xf32>
    %44 = vector.extract_strided_slice %38 {offsets = [5, 0], sizes = [8, 32], strides = [1, 1]} : vector<15x32xf32> to vector<8x32xf32>
    %45 = vector.extract_strided_slice %38 {offsets = [6, 0], sizes = [8, 32], strides = [1, 1]} : vector<15x32xf32> to vector<8x32xf32>
    %46 = vector.extract_strided_slice %38 {offsets = [7, 0], sizes = [8, 32], strides = [1, 1]} : vector<15x32xf32> to vector<8x32xf32>
    %47 = tpu.concatenate %39, %40, %41, %42, %43, %44, %45, %46 in 1 : vector<8x32xf32>, vector<8x32xf32>, vector<8x32xf32>, vector<8x32xf32>, vector<8x32xf32>, vector<8x32xf32>, vector<8x32xf32>, vector<8x32xf32> -> vector<8x256xf32>
    %c0_6 = arith.constant 0 : index
    %c0_7 = arith.constant 0 : index
    %48 = vector.load %arg5[%c0_6, %c0_7] : memref<256x32xf32, #tpu.memory_space<vmem>>, vector<256x32xf32>
    %cst_8 = arith.constant dense<0.000000e+00> : vector<8x32xf32>
    %49 = tpu.matmul %47, %48, %cst_8 {dimension_numbers = #tpu.dot_dimension_numbers<[1], [0], [0], [1], [0, 0, 1, 1], [], []>} : vector<8x256xf32>, vector<256x32xf32>, vector<8x32xf32> -> vector<8x32xf32>
    %c0_9 = arith.constant 0 : index
    %c0_10 = arith.constant 0 : index
    %50 = vector.load %arg6[%c0_9, %c0_10] : memref<1x32xf32, #tpu.memory_space<vmem>>, vector<1x32xf32>
    %51 = vector.broadcast %50 : vector<1x32xf32> to vector<8x32xf32>
    %52 = arith.addf %49, %51 : vector<8x32xf32>
    %53 = vector.extract_strided_slice %52 {offsets = [0, 0], sizes = [1, 32], strides = [1, 1]} : vector<8x32xf32> to vector<1x32xf32>
    %54 = vector.extract_strided_slice %52 {offsets = [1, 0], sizes = [1, 32], strides = [1, 1]} : vector<8x32xf32> to vector<1x32xf32>
    %55 = arith.maximumf %53, %54 : vector<1x32xf32>
    %56 = vector.extract_strided_slice %52 {offsets = [2, 0], sizes = [1, 32], strides = [1, 1]} : vector<8x32xf32> to vector<1x32xf32>
    %57 = arith.maximumf %55, %56 : vector<1x32xf32>
    %58 = vector.extract_strided_slice %52 {offsets = [3, 0], sizes = [1, 32], strides = [1, 1]} : vector<8x32xf32> to vector<1x32xf32>
    %59 = arith.maximumf %57, %58 : vector<1x32xf32>
    %60 = vector.extract_strided_slice %52 {offsets = [4, 0], sizes = [1, 32], strides = [1, 1]} : vector<8x32xf32> to vector<1x32xf32>
    %61 = vector.extract_strided_slice %52 {offsets = [5, 0], sizes = [1, 32], strides = [1, 1]} : vector<8x32xf32> to vector<1x32xf32>
    %62 = arith.maximumf %60, %61 : vector<1x32xf32>
    %63 = vector.extract_strided_slice %52 {offsets = [6, 0], sizes = [1, 32], strides = [1, 1]} : vector<8x32xf32> to vector<1x32xf32>
    %64 = arith.maximumf %62, %63 : vector<1x32xf32>
    %65 = vector.extract_strided_slice %52 {offsets = [7, 0], sizes = [1, 32], strides = [1, 1]} : vector<8x32xf32> to vector<1x32xf32>
    %66 = arith.maximumf %64, %65 : vector<1x32xf32>
    %67 = tpu.concatenate %59, %66 in 1 : vector<1x32xf32>, vector<1x32xf32> -> vector<1x64xf32>
    %c0_11 = arith.constant 0 : index
    %c0_12 = arith.constant 0 : index
    %c0_13 = arith.constant 0 : index
    %68 = vector.load %arg2[%c0_11, %c0_12, %c0_13] : memref<1x8x2xi32, #tpu.memory_space<vmem>>, vector<1x8x2xi32>
    %69 = vector.shape_cast %68 : vector<1x8x2xi32> to vector<8x2xi32>
    %70 = vector.extract_strided_slice %69 {offsets = [0, 0], sizes = [8, 1], strides = [1, 1]} : vector<8x2xi32> to vector<8x1xi32>
    %71 = vector.extract_strided_slice %69 {offsets = [0, 1], sizes = [8, 1], strides = [1, 1]} : vector<8x2xi32> to vector<8x1xi32>
    %72 = tpu.iota {dimensions = array<i32: 1>} : vector<8x100xi32>
    %c50_i32 = arith.constant 50 : i32
    %73 = vector.broadcast %c50_i32 : i32 to vector<8x100xi32>
    %74 = arith.cmpi slt, %72, %73 : vector<8x100xi32>
    %75 = vector.broadcast %70 : vector<8x1xi32> to vector<8x100xi32>
    %76 = arith.cmpi eq, %72, %75 : vector<8x100xi32>
    %77 = arith.extui %76 : vector<8x100xi1> to vector<8x100xi32>
    %78 = arith.sitofp %77 : vector<8x100xi32> to vector<8x100xf32>
    %c50_i32_14 = arith.constant 50 : i32
    %79 = vector.broadcast %c50_i32_14 : i32 to vector<8x100xi32>
    %80 = arith.subi %72, %79 : vector<8x100xi32>
    %81 = vector.broadcast %71 : vector<8x1xi32> to vector<8x100xi32>
    %82 = arith.cmpi eq, %80, %81 : vector<8x100xi32>
    %83 = arith.extui %82 : vector<8x100xi1> to vector<8x100xi32>
    %84 = arith.sitofp %83 : vector<8x100xi32> to vector<8x100xf32>
    %85 = arith.select %74, %78, %84 : vector<8x100xi1>, vector<8x100xf32>
    %c0_15 = arith.constant 0 : index
    %c0_16 = arith.constant 0 : index
    %86 = vector.load %arg7[%c0_15, %c0_16] : memref<100x16xf32, #tpu.memory_space<vmem>>, vector<100x16xf32>
    %cst_17 = arith.constant dense<0.000000e+00> : vector<8x16xf32>
    %87 = tpu.matmul %85, %86, %cst_17 {dimension_numbers = #tpu.dot_dimension_numbers<[1], [0], [0], [1], [0, 0, 1, 1], [], []>} : vector<8x100xf32>, vector<100x16xf32>, vector<8x16xf32> -> vector<8x16xf32>
    %c0_18 = arith.constant 0 : index
    %c0_19 = arith.constant 0 : index
    %88 = vector.load %arg8[%c0_18, %c0_19] : memref<1x16xf32, #tpu.memory_space<vmem>>, vector<1x16xf32>
    %89 = vector.broadcast %88 : vector<1x16xf32> to vector<8x16xf32>
    %90 = arith.addf %87, %89 : vector<8x16xf32>
    %cst_20 = arith.constant 0.000000e+00 : f32
    %91 = vector.broadcast %cst_20 : f32 to vector<8x16xf32>
    %92 = arith.maximumf %90, %91 : vector<8x16xf32>
    %93 = vector.extract_strided_slice %92 {offsets = [0, 0], sizes = [1, 16], strides = [1, 1]} : vector<8x16xf32> to vector<1x16xf32>
    %94 = vector.extract_strided_slice %92 {offsets = [1, 0], sizes = [1, 16], strides = [1, 1]} : vector<8x16xf32> to vector<1x16xf32>
    %95 = arith.maximumf %93, %94 : vector<1x16xf32>
    %96 = vector.extract_strided_slice %92 {offsets = [2, 0], sizes = [1, 16], strides = [1, 1]} : vector<8x16xf32> to vector<1x16xf32>
    %97 = vector.extract_strided_slice %92 {offsets = [3, 0], sizes = [1, 16], strides = [1, 1]} : vector<8x16xf32> to vector<1x16xf32>
    %98 = arith.maximumf %96, %97 : vector<1x16xf32>
    %99 = vector.extract_strided_slice %92 {offsets = [4, 0], sizes = [1, 16], strides = [1, 1]} : vector<8x16xf32> to vector<1x16xf32>
    %100 = vector.extract_strided_slice %92 {offsets = [5, 0], sizes = [1, 16], strides = [1, 1]} : vector<8x16xf32> to vector<1x16xf32>
    %101 = arith.maximumf %99, %100 : vector<1x16xf32>
    %102 = vector.extract_strided_slice %92 {offsets = [6, 0], sizes = [1, 16], strides = [1, 1]} : vector<8x16xf32> to vector<1x16xf32>
    %103 = vector.extract_strided_slice %92 {offsets = [7, 0], sizes = [1, 16], strides = [1, 1]} : vector<8x16xf32> to vector<1x16xf32>
    %104 = arith.maximumf %102, %103 : vector<1x16xf32>
    %105 = tpu.concatenate %95, %98, %101, %104 in 0 : vector<1x16xf32>, vector<1x16xf32>, vector<1x16xf32>, vector<1x16xf32> -> vector<4x16xf32>
    %c0_21 = arith.constant 0 : index
    %c0_22 = arith.constant 0 : index
    %106 = vector.load %arg9[%c0_21, %c0_22] : memref<16x32xf32, #tpu.memory_space<vmem>>, vector<16x32xf32>
    %cst_23 = arith.constant dense<0.000000e+00> : vector<4x32xf32>
    %107 = tpu.matmul %105, %106, %cst_23 {dimension_numbers = #tpu.dot_dimension_numbers<[1], [0], [0], [1], [0, 0, 1, 1], [], []>} : vector<4x16xf32>, vector<16x32xf32>, vector<4x32xf32> -> vector<4x32xf32>
    %c0_24 = arith.constant 0 : index
    %c0_25 = arith.constant 0 : index
    %108 = vector.load %arg11[%c0_24, %c0_25] : memref<1x32xf32, #tpu.memory_space<vmem>>, vector<1x32xf32>
    %109 = vector.broadcast %108 : vector<1x32xf32> to vector<4x32xf32>
    %110 = arith.addf %107, %109 : vector<4x32xf32>
    %c0_26 = arith.constant 0 : index
    %c0_27 = arith.constant 0 : index
    %111 = vector.load %arg10[%c0_26, %c0_27] : memref<8x32xf32, #tpu.memory_space<vmem>>, vector<8x32xf32>
    %112 = tpu.iota {dimensions = array<i32: 1>} : vector<1x32xi32>
    %c16_i32 = arith.constant 16 : i32
    %113 = vector.broadcast %c16_i32 : i32 to vector<1x32xi32>
    %114 = arith.cmpi sge, %112, %113 : vector<1x32xi32>
    %c24_i32 = arith.constant 24 : i32
    %115 = vector.broadcast %c24_i32 : i32 to vector<1x32xi32>
    %116 = arith.cmpi slt, %112, %115 : vector<1x32xi32>
    %117 = arith.andi %114, %116 : vector<1x32xi1>
    %cst_28 = arith.constant 0.000000e+00 : f32
    %118 = vector.broadcast %cst_28 : f32 to vector<1x8xf32>
    %cst_29 = arith.constant 0.000000e+00 : f32
    %119 = vector.broadcast %cst_29 : f32 to vector<1x8xf32>
    %120 = vector.extract_strided_slice %110 {offsets = [0, 0], sizes = [1, 32], strides = [1, 1]} : vector<4x32xf32> to vector<1x32xf32>
    %cst_30 = arith.constant dense<0.000000e+00> : vector<1x32xf32>
    %121 = tpu.matmul %118, %111, %cst_30 {dimension_numbers = #tpu.dot_dimension_numbers<[1], [0], [0], [1], [0, 0, 1, 1], [], []>} : vector<1x8xf32>, vector<8x32xf32>, vector<1x32xf32> -> vector<1x32xf32>
    %122 = arith.addf %120, %121 : vector<1x32xf32>
    %123 = arith.negf %122 : vector<1x32xf32>
    %124 = math.exp %123 : vector<1x32xf32>
    %cst_31 = arith.constant 1.000000e+00 : f32
    %125 = vector.broadcast %cst_31 : f32 to vector<1x32xf32>
    %126 = arith.addf %125, %124 : vector<1x32xf32>
    %127 = arith.divf %125, %126 : vector<1x32xf32>
    %cst_32 = arith.constant 2.000000e+00 : f32
    %128 = vector.broadcast %cst_32 : f32 to vector<1x32xf32>
    %129 = arith.mulf %128, %127 : vector<1x32xf32>
    %cst_33 = arith.constant 1.000000e+00 : f32
    %130 = vector.broadcast %cst_33 : f32 to vector<1x32xf32>
    %131 = arith.subf %129, %130 : vector<1x32xf32>
    %132 = arith.select %117, %131, %127 : vector<1x32xi1>, vector<1x32xf32>
    %133 = vector.extract_strided_slice %132 {offsets = [0, 0], sizes = [1, 8], strides = [1, 1]} : vector<1x32xf32> to vector<1x8xf32>
    %134 = vector.extract_strided_slice %132 {offsets = [0, 8], sizes = [1, 8], strides = [1, 1]} : vector<1x32xf32> to vector<1x8xf32>
    %135 = vector.extract_strided_slice %132 {offsets = [0, 16], sizes = [1, 8], strides = [1, 1]} : vector<1x32xf32> to vector<1x8xf32>
    %136 = vector.extract_strided_slice %132 {offsets = [0, 24], sizes = [1, 8], strides = [1, 1]} : vector<1x32xf32> to vector<1x8xf32>
    %137 = arith.mulf %134, %119 : vector<1x8xf32>
    %138 = arith.mulf %133, %135 : vector<1x8xf32>
    %139 = arith.addf %137, %138 : vector<1x8xf32>
    %140 = math.tanh %139 : vector<1x8xf32>
    %141 = arith.mulf %136, %140 : vector<1x8xf32>
    %142 = vector.extract_strided_slice %110 {offsets = [1, 0], sizes = [1, 32], strides = [1, 1]} : vector<4x32xf32> to vector<1x32xf32>
    %cst_34 = arith.constant dense<0.000000e+00> : vector<1x32xf32>
    %143 = tpu.matmul %141, %111, %cst_34 {dimension_numbers = #tpu.dot_dimension_numbers<[1], [0], [0], [1], [0, 0, 1, 1], [], []>} : vector<1x8xf32>, vector<8x32xf32>, vector<1x32xf32> -> vector<1x32xf32>
    %144 = arith.addf %142, %143 : vector<1x32xf32>
    %145 = arith.negf %144 : vector<1x32xf32>
    %146 = math.exp %145 : vector<1x32xf32>
    %cst_35 = arith.constant 1.000000e+00 : f32
    %147 = vector.broadcast %cst_35 : f32 to vector<1x32xf32>
    %148 = arith.addf %147, %146 : vector<1x32xf32>
    %149 = arith.divf %147, %148 : vector<1x32xf32>
    %cst_36 = arith.constant 2.000000e+00 : f32
    %150 = vector.broadcast %cst_36 : f32 to vector<1x32xf32>
    %151 = arith.mulf %150, %149 : vector<1x32xf32>
    %cst_37 = arith.constant 1.000000e+00 : f32
    %152 = vector.broadcast %cst_37 : f32 to vector<1x32xf32>
    %153 = arith.subf %151, %152 : vector<1x32xf32>
    %154 = arith.select %117, %153, %149 : vector<1x32xi1>, vector<1x32xf32>
    %155 = vector.extract_strided_slice %154 {offsets = [0, 0], sizes = [1, 8], strides = [1, 1]} : vector<1x32xf32> to vector<1x8xf32>
    %156 = vector.extract_strided_slice %154 {offsets = [0, 8], sizes = [1, 8], strides = [1, 1]} : vector<1x32xf32> to vector<1x8xf32>
    %157 = vector.extract_strided_slice %154 {offsets = [0, 16], sizes = [1, 8], strides = [1, 1]} : vector<1x32xf32> to vector<1x8xf32>
    %158 = vector.extract_strided_slice %154 {offsets = [0, 24], sizes = [1, 8], strides = [1, 1]} : vector<1x32xf32> to vector<1x8xf32>
    %159 = arith.mulf %156, %139 : vector<1x8xf32>
    %160 = arith.mulf %155, %157 : vector<1x8xf32>
    %161 = arith.addf %159, %160 : vector<1x8xf32>
    %162 = math.tanh %161 : vector<1x8xf32>
    %163 = arith.mulf %158, %162 : vector<1x8xf32>
    %164 = vector.extract_strided_slice %110 {offsets = [2, 0], sizes = [1, 32], strides = [1, 1]} : vector<4x32xf32> to vector<1x32xf32>
    %cst_38 = arith.constant dense<0.000000e+00> : vector<1x32xf32>
    %165 = tpu.matmul %163, %111, %cst_38 {dimension_numbers = #tpu.dot_dimension_numbers<[1], [0], [0], [1], [0, 0, 1, 1], [], []>} : vector<1x8xf32>, vector<8x32xf32>, vector<1x32xf32> -> vector<1x32xf32>
    %166 = arith.addf %164, %165 : vector<1x32xf32>
    %167 = arith.negf %166 : vector<1x32xf32>
    %168 = math.exp %167 : vector<1x32xf32>
    %cst_39 = arith.constant 1.000000e+00 : f32
    %169 = vector.broadcast %cst_39 : f32 to vector<1x32xf32>
    %170 = arith.addf %169, %168 : vector<1x32xf32>
    %171 = arith.divf %169, %170 : vector<1x32xf32>
    %cst_40 = arith.constant 2.000000e+00 : f32
    %172 = vector.broadcast %cst_40 : f32 to vector<1x32xf32>
    %173 = arith.mulf %172, %171 : vector<1x32xf32>
    %cst_41 = arith.constant 1.000000e+00 : f32
    %174 = vector.broadcast %cst_41 : f32 to vector<1x32xf32>
    %175 = arith.subf %173, %174 : vector<1x32xf32>
    %176 = arith.select %117, %175, %171 : vector<1x32xi1>, vector<1x32xf32>
    %177 = vector.extract_strided_slice %176 {offsets = [0, 0], sizes = [1, 8], strides = [1, 1]} : vector<1x32xf32> to vector<1x8xf32>
    %178 = vector.extract_strided_slice %176 {offsets = [0, 8], sizes = [1, 8], strides = [1, 1]} : vector<1x32xf32> to vector<1x8xf32>
    %179 = vector.extract_strided_slice %176 {offsets = [0, 16], sizes = [1, 8], strides = [1, 1]} : vector<1x32xf32> to vector<1x8xf32>
    %180 = vector.extract_strided_slice %176 {offsets = [0, 24], sizes = [1, 8], strides = [1, 1]} : vector<1x32xf32> to vector<1x8xf32>
    %181 = arith.mulf %178, %161 : vector<1x8xf32>
    %182 = arith.mulf %177, %179 : vector<1x8xf32>
    %183 = arith.addf %181, %182 : vector<1x8xf32>
    %184 = math.tanh %183 : vector<1x8xf32>
    %185 = arith.mulf %180, %184 : vector<1x8xf32>
    %186 = vector.extract_strided_slice %110 {offsets = [3, 0], sizes = [1, 32], strides = [1, 1]} : vector<4x32xf32> to vector<1x32xf32>
    %cst_42 = arith.constant dense<0.000000e+00> : vector<1x32xf32>
    %187 = tpu.matmul %185, %111, %cst_42 {dimension_numbers = #tpu.dot_dimension_numbers<[1], [0], [0], [1], [0, 0, 1, 1], [], []>} : vector<1x8xf32>, vector<8x32xf32>, vector<1x32xf32> -> vector<1x32xf32>
    %188 = arith.addf %186, %187 : vector<1x32xf32>
    %189 = arith.negf %188 : vector<1x32xf32>
    %190 = math.exp %189 : vector<1x32xf32>
    %cst_43 = arith.constant 1.000000e+00 : f32
    %191 = vector.broadcast %cst_43 : f32 to vector<1x32xf32>
    %192 = arith.addf %191, %190 : vector<1x32xf32>
    %193 = arith.divf %191, %192 : vector<1x32xf32>
    %cst_44 = arith.constant 2.000000e+00 : f32
    %194 = vector.broadcast %cst_44 : f32 to vector<1x32xf32>
    %195 = arith.mulf %194, %193 : vector<1x32xf32>
    %cst_45 = arith.constant 1.000000e+00 : f32
    %196 = vector.broadcast %cst_45 : f32 to vector<1x32xf32>
    %197 = arith.subf %195, %196 : vector<1x32xf32>
    %198 = arith.select %117, %197, %193 : vector<1x32xi1>, vector<1x32xf32>
    %199 = vector.extract_strided_slice %198 {offsets = [0, 0], sizes = [1, 8], strides = [1, 1]} : vector<1x32xf32> to vector<1x8xf32>
    %200 = vector.extract_strided_slice %198 {offsets = [0, 8], sizes = [1, 8], strides = [1, 1]} : vector<1x32xf32> to vector<1x8xf32>
    %201 = vector.extract_strided_slice %198 {offsets = [0, 16], sizes = [1, 8], strides = [1, 1]} : vector<1x32xf32> to vector<1x8xf32>
    %202 = vector.extract_strided_slice %198 {offsets = [0, 24], sizes = [1, 8], strides = [1, 1]} : vector<1x32xf32> to vector<1x8xf32>
    %203 = arith.mulf %200, %183 : vector<1x8xf32>
    %204 = arith.mulf %199, %201 : vector<1x8xf32>
    %205 = arith.addf %203, %204 : vector<1x8xf32>
    %206 = math.tanh %205 : vector<1x8xf32>
    %207 = arith.mulf %202, %206 : vector<1x8xf32>
    %208 = tpu.concatenate %141, %163, %185, %207 in 1 : vector<1x8xf32>, vector<1x8xf32>, vector<1x8xf32>, vector<1x8xf32> -> vector<1x32xf32>
    %209 = tpu.concatenate %67, %208 in 1 : vector<1x64xf32>, vector<1x32xf32> -> vector<1x96xf32>
    %c0_46 = arith.constant 0 : index
    %c0_47 = arith.constant 0 : index
    %210 = vector.load %arg12[%c0_46, %c0_47] : memref<96x100xf32, #tpu.memory_space<vmem>>, vector<96x100xf32>
    %cst_48 = arith.constant dense<0.000000e+00> : vector<1x100xf32>
    %211 = tpu.matmul %209, %210, %cst_48 {dimension_numbers = #tpu.dot_dimension_numbers<[1], [0], [0], [1], [0, 0, 1, 1], [], []>} : vector<1x96xf32>, vector<96x100xf32>, vector<1x100xf32> -> vector<1x100xf32>
    %c0_49 = arith.constant 0 : index
    %c0_50 = arith.constant 0 : index
    %212 = vector.load %arg13[%c0_49, %c0_50] : memref<1x100xf32, #tpu.memory_space<vmem>>, vector<1x100xf32>
    %213 = arith.addf %211, %212 : vector<1x100xf32>
    %cst_51 = arith.constant -5.000000e-01 : f32
    %cst_52 = arith.constant 5.000000e-01 : f32
    %214 = vector.broadcast %cst_51 : f32 to vector<1x100xf32>
    %215 = arith.maximumf %214, %213 : vector<1x100xf32>
    %216 = vector.broadcast %cst_52 : f32 to vector<1x100xf32>
    %217 = arith.minimumf %216, %215 : vector<1x100xf32>
    %c0_53 = arith.constant 0 : index
    %c0_54 = arith.constant 0 : index
    %218 = vector.load %arg14[%c0_53, %c0_54] : memref<100x4xf32, #tpu.memory_space<vmem>>, vector<100x4xf32>
    %cst_55 = arith.constant dense<0.000000e+00> : vector<1x4xf32>
    %219 = tpu.matmul %217, %218, %cst_55 {dimension_numbers = #tpu.dot_dimension_numbers<[1], [0], [0], [1], [0, 0, 1, 1], [], []>} : vector<1x100xf32>, vector<100x4xf32>, vector<1x4xf32> -> vector<1x4xf32>
    %c0_56 = arith.constant 0 : index
    %c0_57 = arith.constant 0 : index
    %220 = vector.load %arg15[%c0_56, %c0_57] : memref<1x4xf32, #tpu.memory_space<vmem>>, vector<1x4xf32>
    %221 = arith.addf %219, %220 : vector<1x4xf32>
    %c0_58 = arith.constant 0 : index
    %c0_59 = arith.constant 0 : index
    %c0_60 = arith.constant 0 : index
    %222 = vector.load %arg16[%c0_58, %c0_59, %c0_60] : memref<1x1x4xf32, #tpu.memory_space<vmem>>, vector<1x1x4xf32>
    %223 = vector.shape_cast %222 : vector<1x1x4xf32> to vector<1x4xf32>
    %224 = vector.shape_cast %221 : vector<1x4xf32> to vector<1x1x4xf32>
    tpu.vector_store %arg16[%c0_58, %c0_59, %c0_60], %224 {strides = array<i32>} : memref<1x1x4xf32, #tpu.memory_space<vmem>>, vector<1x1x4xf32>,
    return
  }
  func.func @transform_0(%arg0: i32) -> (i32, i32, i32) {
    %c0_i32 = arith.constant 0 : i32
    %c0_i32_0 = arith.constant 0 : i32
    %c0_i32_1 = arith.constant 0 : i32
    return %arg0, %c0_i32, %c0_i32_0 : i32, i32, i32
  }
  func.func @transform_1(%arg0: i32) -> (i32, i32, i32) {
    %c0_i32 = arith.constant 0 : i32
    %c0_i32_0 = arith.constant 0 : i32
    %c0_i32_1 = arith.constant 0 : i32
    return %arg0, %c0_i32, %c0_i32_0 : i32, i32, i32
  }
  func.func @transform_2(%arg0: i32) -> (i32, i32) {
    %c0_i32 = arith.constant 0 : i32
    %c0_i32_0 = arith.constant 0 : i32
    %c0_i32_1 = arith.constant 0 : i32
    return %c0_i32, %c0_i32_0 : i32, i32
  }
  func.func @transform_3(%arg0: i32) -> (i32, i32) {
    %c0_i32 = arith.constant 0 : i32
    %c0_i32_0 = arith.constant 0 : i32
    %c0_i32_1 = arith.constant 0 : i32
    return %c0_i32, %c0_i32_0 : i32, i32
  }
  func.func @transform_4(%arg0: i32) -> (i32, i32) {
    %c0_i32 = arith.constant 0 : i32
    %c0_i32_0 = arith.constant 0 : i32
    %c0_i32_1 = arith.constant 0 : i32
    return %c0_i32, %c0_i32_0 : i32, i32
  }
  func.func @transform_5(%arg0: i32) -> (i32, i32) {
    %c0_i32 = arith.constant 0 : i32
    %c0_i32_0 = arith.constant 0 : i32
    %c0_i32_1 = arith.constant 0 : i32
    return %c0_i32, %c0_i32_0 : i32, i32
  }
  func.func @transform_6(%arg0: i32) -> (i32, i32) {
    %c0_i32 = arith.constant 0 : i32
    %c0_i32_0 = arith.constant 0 : i32
    %c0_i32_1 = arith.constant 0 : i32
    return %c0_i32, %c0_i32_0 : i32, i32
  }
  func.func @transform_7(%arg0: i32) -> (i32, i32) {
    %c0_i32 = arith.constant 0 : i32
    %c0_i32_0 = arith.constant 0 : i32
    %c0_i32_1 = arith.constant 0 : i32
    return %c0_i32, %c0_i32_0 : i32, i32
  }
  func.func @transform_8(%arg0: i32) -> (i32, i32) {
    %c0_i32 = arith.constant 0 : i32
    %c0_i32_0 = arith.constant 0 : i32
    %c0_i32_1 = arith.constant 0 : i32
    return %c0_i32, %c0_i32_0 : i32, i32
  }
  func.func @transform_9(%arg0: i32) -> (i32, i32) {
    %c0_i32 = arith.constant 0 : i32
    %c0_i32_0 = arith.constant 0 : i32
    %c0_i32_1 = arith.constant 0 : i32
    return %c0_i32, %c0_i32_0 : i32, i32
  }
  func.func @transform_10(%arg0: i32) -> (i32, i32) {
    %c0_i32 = arith.constant 0 : i32
    %c0_i32_0 = arith.constant 0 : i32
    %c0_i32_1 = arith.constant 0 : i32
    return %c0_i32, %c0_i32_0 : i32, i32
  }
  func.func @transform_11(%arg0: i32) -> (i32, i32) {
    %c0_i32 = arith.constant 0 : i32
    %c0_i32_0 = arith.constant 0 : i32
    %c0_i32_1 = arith.constant 0 : i32
    return %c0_i32, %c0_i32_0 : i32, i32
  }
  func.func @transform_12(%arg0: i32) -> (i32, i32) {
    %c0_i32 = arith.constant 0 : i32
    %c0_i32_0 = arith.constant 0 : i32
    %c0_i32_1 = arith.constant 0 : i32
    return %c0_i32, %c0_i32_0 : i32, i32
  }
  func.func @transform_13(%arg0: i32) -> (i32, i32) {
    %c0_i32 = arith.constant 0 : i32
    %c0_i32_0 = arith.constant 0 : i32
    %c0_i32_1 = arith.constant 0 : i32
    return %c0_i32, %c0_i32_0 : i32, i32
  }
  func.func @transform_14(%arg0: i32) -> (i32, i32) {
    %c0_i32 = arith.constant 0 : i32
    %c0_i32_0 = arith.constant 0 : i32
    %c0_i32_1 = arith.constant 0 : i32
    return %c0_i32, %c0_i32_0 : i32, i32
  }
  func.func @transform_15(%arg0: i32) -> (i32, i32, i32) {
    %c0_i32 = arith.constant 0 : i32
    %c0_i32_0 = arith.constant 0 : i32
    %c0_i32_1 = arith.constant 0 : i32
    return %arg0, %c0_i32, %c0_i32_0 : i32, i32, i32
  }
}

</mosaic_0001>

<llo_original>
// kernel: multinet_forward.1
$region0: #{multinet_forward.1}
  #allocation0 [shape = 'u32[]', space=smem, size = 0x4, offset = 0x4, fixed_abs, tag = 'smem constant byte address 0x4 - core index']
  #allocation1 [shape = 'u32[144,128]{1,0:T(1,128)}', space=vmem, size = 0x12000, scoped, tag = 'internal scratch']
  %s0 = inlined_call_operand.vmem [shape: f32[2,67,32], index: 0, kind: input, shape index: {}]
  %s1 = inlined_call_operand.vmem [shape: s32[2,8,2], index: 1, kind: input, shape index: {}]
  %s2 = inlined_call_operand.vmem [shape: f32[256,32], index: 2, kind: input, shape index: {}]
  %s3 = inlined_call_operand.vmem [shape: f32[1,32], index: 3, kind: input, shape index: {}]
  %s4 = inlined_call_operand.vmem [shape: f32[256,32], index: 4, kind: input, shape index: {}]
  %s5 = inlined_call_operand.vmem [shape: f32[1,32], index: 5, kind: input, shape index: {}]
  %s6 = inlined_call_operand.vmem [shape: f32[100,16], index: 6, kind: input, shape index: {}]
  %s7 = inlined_call_operand.vmem [shape: f32[1,16], index: 7, kind: input, shape index: {}]
  %s8 = inlined_call_operand.vmem [shape: f32[16,32], index: 8, kind: input, shape index: {}]
  %s9 = inlined_call_operand.vmem [shape: f32[8,32], index: 9, kind: input, shape index: {}]
  %s10 = inlined_call_operand.vmem [shape: f32[1,32], index: 10, kind: input, shape index: {}]
  %s11 = inlined_call_operand.vmem [shape: f32[96,100], index: 11, kind: input, shape index: {}]
  %s12 = inlined_call_operand.vmem [shape: f32[1,100], index: 12, kind: input, shape index: {}]
  %s13 = inlined_call_operand.vmem [shape: f32[100,4], index: 13, kind: input, shape index: {}]
  %s14 = inlined_call_operand.vmem [shape: f32[1,4], index: 14, kind: input, shape index: {}]
  %s15 = inlined_call_operand.hbm [shape: f32[2,1,4], index: 15, kind: output, shape index: {}]
  %s16 = sld [smem:[#allocation0]]
  $region93: #{multinet_forward.1} parent=0
    _
  %s18 = ssub.s32 1, %s16
  %s19 = scalar_select 0, %s18, %s16
  $region1: #{multinet_forward.1} parent=0
    #allocation2 [shape = 'u8[1024]{0}', space=vmem, size = 0x400, scoped, tag = 'output window, operand 0']
    #allocation3 [shape = 's32[2]{0}', space=sflag, size = 0x8, scoped, tag = 'scoped memory for multinet_forward.1']
    %20 = vsyncpa [#allocation3], 0
    %s21 = scalar_lea.sflag [#allocation3], 1
    %22 = vsyncpa %s21, 0
    loop: start=0, step=1, limit=4
    $region2: #{multinet_forward.1} parent=1 // loop_pre_header
      _
    $region3: #{multinet_forward.1} parent=1 // loop_header
      %s24 = sphi 0, %s28
      %p25 = scmp.ge.s32.totalorder %s24, 4
      %s34 = sphi 0, %s36
      %s37 = sphi 0, %s34
      %s38 = sphi 0, %s37
      %s54 = sphi 0, %s38
      %s60 = sphi 0, %s62
      %s63 = sphi 0, %s60
      %s64 = sphi 0, %s63
      %s80 = sphi 0, %s64
      %s84 = sphi 0, %s84
      %s86 = sphi 0, %s84
      %s87 = sphi 0, %s86
      %s101 = sphi 0, %s87
      %s105 = sphi 0, %s105
      %s107 = sphi 0, %s105
      %s108 = sphi 0, %s107
      %s122 = sphi 0, %s108
      %s126 = sphi 0, %s126
      %s128 = sphi 0, %s126
      %s129 = sphi 0, %s128
      %s143 = sphi 0, %s129
      %s147 = sphi 0, %s147
      %s149 = sphi 0, %s147
      %s150 = sphi 0, %s149
      %s164 = sphi 0, %s150
      %s168 = sphi 0, %s168
      %s170 = sphi 0, %s168
      %s171 = sphi 0, %s170
      %s185 = sphi 0, %s171
      %s189 = sphi 0, %s189
      %s191 = sphi 0, %s189
      %s192 = sphi 0, %s191
      %s206 = sphi 0, %s192
      %s210 = sphi 0, %s210
      %s212 = sphi 0, %s210
      %s213 = sphi 0, %s212
      %s227 = sphi 0, %s213
      %s231 = sphi 0, %s231
      %s233 = sphi 0, %s231
      %s234 = sphi 0, %s233
      %s248 = sphi 0, %s234
      %s252 = sphi 0, %s252
      %s254 = sphi 0, %s252
      %s255 = sphi 0, %s254
      %s269 = sphi 0, %s255
      %s273 = sphi 0, %s273
      %s275 = sphi 0, %s273
      %s276 = sphi 0, %s275
      %s290 = sphi 0, %s276
      %s294 = sphi 0, %s294
      %s296 = sphi 0, %s294
      %s297 = sphi 0, %s296
      %s311 = sphi 0, %s297
      %s315 = sphi 0, %s315
      %s317 = sphi 0, %s315
      %s318 = sphi 0, %s317
      %s332 = sphi 0, %s318
      %s336 = sphi 0, %s336
      %s338 = sphi 0, %s336
      %s339 = sphi 0, %s338
      %s353 = sphi 0, %s339
      %s359 = sphi 0, %s361
      %s362 = sphi 0, %s359
      %s363 = sphi 0, %s362
      %s379 = sphi 0, %s363
    $region4: #{multinet_forward.1} parent=1 // loop_header_branch
      %27 = sbr.rel (%p25) target = $region8
    $region5: #{multinet_forward.1} parent=1 // loop_body
      %s29 = ssub.s32 %s24, 1
      %s30 = ssub.s32 %s24, 2
      %s31 = sadd.s32 %s24, 1
      %s32 = ssub.s32 %s24, %s31
      %p33 = scmp.eq.s32.totalorder %s32, 0
      %s35 = sadd.s32 %s34, 1
      %s36 = scalar_select %p33, %s34, %s35
      %p39 = pneg %p33
      %p40 = scmp.eq.s32.totalorder %s24, 1
      %p41 = por %p39, %p40
      %p42 = scmp.ne.s32.totalorder %s34, %s37
      %p43 = scmp.eq.s32.totalorder %s24, 0
      %p44 = por %p42, %p43
      %p45 = scmp.ne.s32.totalorder %s34, %s37
      %p46 = scmp.eq.s32.totalorder %s29, 1
      %p47 = por %p45, %p46
      %p48 = scmp.ne.s32.totalorder %s37, %s38
      %p49 = scmp.eq.s32.totalorder %s29, 0
      %p50 = por %p48, %p49
      %p51 = scmp.ne.s32.totalorder %s37, %s38
      %p52 = scmp.eq.s32.totalorder %s30, 1
      %p53 = por %p51, %p52
      %p55 = scmp.ne.s32.totalorder %s38, %s54
      %p56 = scmp.eq.s32.totalorder %s30, 0
      %p57 = por %p55, %p56
      %s58 = ssub.s32 %s24, %s31
      %p59 = scmp.eq.s32.totalorder %s58, 0
      %s61 = sadd.s32 %s60, 1
      %s62 = scalar_select %p59, %s60, %s61
      %p65 = pneg %p59
      %p66 = scmp.eq.s32.totalorder %s24, 1
      %p67 = por %p65, %p66
      %p68 = scmp.ne.s32.totalorder %s60, %s63
      %p69 = scmp.eq.s32.totalorder %s24, 0
      %p70 = por %p68, %p69
      %p71 = scmp.ne.s32.totalorder %s60, %s63
      %p72 = scmp.eq.s32.totalorder %s29, 1
      %p73 = por %p71, %p72
      %p74 = scmp.ne.s32.totalorder %s63, %s64
      %p75 = scmp.eq.s32.totalorder %s29, 0
      %p76 = por %p74, %p75
      %p77 = scmp.ne.s32.totalorder %s63, %s64
      %p78 = scmp.eq.s32.totalorder %s30, 1
      %p79 = por %p77, %p78
      %p81 = scmp.ne.s32.totalorder %s64, %s80
      %p82 = scmp.eq.s32.totalorder %s30, 0
      %p83 = por %p81, %p82
      %s85 = sadd.s32 %s84, 1
      %p88 = scmp.eq.s32.totalorder %s24, 1
      %p89 = scmp.ne.s32.totalorder %s84, %s86
      %p90 = scmp.eq.s32.totalorder %s24, 0
      %p91 = por %p89, %p90
      %p92 = scmp.ne.s32.totalorder %s84, %s86
      %p93 = scmp.eq.s32.totalorder %s29, 1
      %p94 = por %p92, %p93
      %p95 = scmp.ne.s32.totalorder %s86, %s87
      %p96 = scmp.eq.s32.totalorder %s29, 0
      %p97 = por %p95, %p96
      %p98 = scmp.ne.s32.totalorder %s86, %s87
      %p99 = scmp.eq.s32.totalorder %s30, 1
      %p100 = por %p98, %p99
      %p102 = scmp.ne.s32.totalorder %s87, %s101
      %p103 = scmp.eq.s32.totalorder %s30, 0
      %p104 = por %p102, %p103
      %s106 = sadd.s32 %s105, 1
      %p109 = scmp.eq.s32.totalorder %s24, 1
      %p110 = scmp.ne.s32.totalorder %s105, %s107
      %p111 = scmp.eq.s32.totalorder %s24, 0
      %p112 = por %p110, %p111
      %p113 = scmp.ne.s32.totalorder %s105, %s107
      %p114 = scmp.eq.s32.totalorder %s29, 1
      %p115 = por %p113, %p114
      %p116 = scmp.ne.s32.totalorder %s107, %s108
      %p117 = scmp.eq.s32.totalorder %s29, 0
      %p118 = por %p116, %p117
      %p119 = scmp.ne.s32.totalorder %s107, %s108
      %p120 = scmp.eq.s32.totalorder %s30, 1
      %p121 = por %p119, %p120
      %p123 = scmp.ne.s32.totalorder %s108, %s122
      %p124 = scmp.eq.s32.totalorder %s30, 0
      %p125 = por %p123, %p124
      %s127 = sadd.s32 %s126, 1
      %p130 = scmp.eq.s32.totalorder %s24, 1
      %p131 = scmp.ne.s32.totalorder %s126, %s128
      %p132 = scmp.eq.s32.totalorder %s24, 0
      %p133 = por %p131, %p132
      %p134 = scmp.ne.s32.totalorder %s126, %s128
      %p135 = scmp.eq.s32.totalorder %s29, 1
      %p136 = por %p134, %p135
      %p137 = scmp.ne.s32.totalorder %s128, %s129
      %p138 = scmp.eq.s32.totalorder %s29, 0
      %p139 = por %p137, %p138
      %p140 = scmp.ne.s32.totalorder %s128, %s129
      %p141 = scmp.eq.s32.totalorder %s30, 1
      %p142 = por %p140, %p141
      %p144 = scmp.ne.s32.totalorder %s129, %s143
      %p145 = scmp.eq.s32.totalorder %s30, 0
      %p146 = por %p144, %p145
      %s148 = sadd.s32 %s147, 1
      %p151 = scmp.eq.s32.totalorder %s24, 1
      %p152 = scmp.ne.s32.totalorder %s147, %s149
      %p153 = scmp.eq.s32.totalorder %s24, 0
      %p154 = por %p152, %p153
      %p155 = scmp.ne.s32.totalorder %s147, %s149
      %p156 = scmp.eq.s32.totalorder %s29, 1
      %p157 = por %p155, %p156
      %p158 = scmp.ne.s32.totalorder %s149, %s150
      %p159 = scmp.eq.s32.totalorder %s29, 0
      %p160 = por %p158, %p159
      %p161 = scmp.ne.s32.totalorder %s149, %s150
      %p162 = scmp.eq.s32.totalorder %s30, 1
      %p163 = por %p161, %p162
      %p165 = scmp.ne.s32.totalorder %s150, %s164
      %p166 = scmp.eq.s32.totalorder %s30, 0
      %p167 = por %p165, %p166
      %s169 = sadd.s32 %s168, 1
      %p172 = scmp.eq.s32.totalorder %s24, 1
      %p173 = scmp.ne.s32.totalorder %s168, %s170
      %p174 = scmp.eq.s32.totalorder %s24, 0
      %p175 = por %p173, %p174
      %p176 = scmp.ne.s32.totalorder %s168, %s170
      %p177 = scmp.eq.s32.totalorder %s29, 1
      %p178 = por %p176, %p177
      %p179 = scmp.ne.s32.totalorder %s170, %s171
      %p180 = scmp.eq.s32.totalorder %s29, 0
      %p181 = por %p179, %p180
      %p182 = scmp.ne.s32.totalorder %s170, %s171
      %p183 = scmp.eq.s32.totalorder %s30, 1
      %p184 = por %p182, %p183
      %p186 = scmp.ne.s32.totalorder %s171, %s185
      %p187 = scmp.eq.s32.totalorder %s30, 0
      %p188 = por %p186, %p187
      %s190 = sadd.s32 %s189, 1
      %p193 = scmp.eq.s32.totalorder %s24, 1
      %p194 = scmp.ne.s32.totalorder %s189, %s191
      %p195 = scmp.eq.s32.totalorder %s24, 0
      %p196 = por %p194, %p195
      %p197 = scmp.ne.s32.totalorder %s189, %s191
      %p198 = scmp.eq.s32.totalorder %s29, 1
      %p199 = por %p197, %p198
      %p200 = scmp.ne.s32.totalorder %s191, %s192
      %p201 = scmp.eq.s32.totalorder %s29, 0
      %p202 = por %p200, %p201
      %p203 = scmp.ne.s32.totalorder %s191, %s192
      %p204 = scmp.eq.s32.totalorder %s30, 1
      %p205 = por %p203, %p204
      %p207 = scmp.ne.s32.totalorder %s192, %s206
      %p208 = scmp.eq.s32.totalorder %s30, 0
      %p209 = por %p207, %p208
      %s211 = sadd.s32 %s210, 1
      %p214 = scmp.eq.s32.totalorder %s24, 1
      %p215 = scmp.ne.s32.totalorder %s210, %s212
      %p216 = scmp.eq.s32.totalorder %s24, 0
      %p217 = por %p215, %p216
      %p218 = scmp.ne.s32.totalorder %s210, %s212
      %p219 = scmp.eq.s32.totalorder %s29, 1
      %p220 = por %p218, %p219
      %p221 = scmp.ne.s32.totalorder %s212, %s213
      %p222 = scmp.eq.s32.totalorder %s29, 0
      %p223 = por %p221, %p222
      %p224 = scmp.ne.s32.totalorder %s212, %s213
      %p225 = scmp.eq.s32.totalorder %s30, 1
      %p226 = por %p224, %p225
      %p228 = scmp.ne.s32.totalorder %s213, %s227
      %p229 = scmp.eq.s32.totalorder %s30, 0
      %p230 = por %p228, %p229
      %s232 = sadd.s32 %s231, 1
      %p235 = scmp.eq.s32.totalorder %s24, 1
      %p236 = scmp.ne.s32.totalorder %s231, %s233
      %p237 = scmp.eq.s32.totalorder %s24, 0
      %p238 = por %p236, %p237
      %p239 = scmp.ne.s32.totalorder %s231, %s233
      %p240 = scmp.eq.s32.totalorder %s29, 1
      %p241 = por %p239, %p240
      %p242 = scmp.ne.s32.totalorder %s233, %s234
      %p243 = scmp.eq.s32.totalorder %s29, 0
      %p244 = por %p242, %p243
      %p245 = scmp.ne.s32.totalorder %s233, %s234
      %p246 = scmp.eq.s32.totalorder %s30, 1
      %p247 = por %p245, %p246
      %p249 = scmp.ne.s32.totalorder %s234, %s248
      %p250 = scmp.eq.s32.totalorder %s30, 0
      %p251 = por %p249, %p250
      %s253 = sadd.s32 %s252, 1
      %p256 = scmp.eq.s32.totalorder %s24, 1
      %p257 = scmp.ne.s32.totalorder %s252, %s254
      %p258 = scmp.eq.s32.totalorder %s24, 0
      %p259 = por %p257, %p258
      %p260 = scmp.ne.s32.totalorder %s252, %s254
      %p261 = scmp.eq.s32.totalorder %s29, 1
      %p262 = por %p260, %p261
      %p263 = scmp.ne.s32.totalorder %s254, %s255
      %p264 = scmp.eq.s32.totalorder %s29, 0
      %p265 = por %p263, %p264
      %p266 = scmp.ne.s32.totalorder %s254, %s255
      %p267 = scmp.eq.s32.totalorder %s30, 1
      %p268 = por %p266, %p267
      %p270 = scmp.ne.s32.totalorder %s255, %s269
      %p271 = scmp.eq.s32.totalorder %s30, 0
      %p272 = por %p270, %p271
      %s274 = sadd.s32 %s273, 1
      %p277 = scmp.eq.s32.totalorder %s24, 1
      %p278 = scmp.ne.s32.totalorder %s273, %s275
      %p279 = scmp.eq.s32.totalorder %s24, 0
      %p280 = por %p278, %p279
      %p281 = scmp.ne.s32.totalorder %s273, %s275
      %p282 = scmp.eq.s32.totalorder %s29, 1
      %p283 = por %p281, %p282
      %p284 = scmp.ne.s32.totalorder %s275, %s276
      %p285 = scmp.eq.s32.totalorder %s29, 0
      %p286 = por %p284, %p285
      %p287 = scmp.ne.s32.totalorder %s275, %s276
      %p288 = scmp.eq.s32.totalorder %s30, 1
      %p289 = por %p287, %p288
      %p291 = scmp.ne.s32.totalorder %s276, %s290
      %p292 = scmp.eq.s32.totalorder %s30, 0
      %p293 = por %p291, %p292
      %s295 = sadd.s32 %s294, 1
      %p298 = scmp.eq.s32.totalorder %s24, 1
      %p299 = scmp.ne.s32.totalorder %s294, %s296
      %p300 = scmp.eq.s32.totalorder %s24, 0
      %p301 = por %p299, %p300
      %p302 = scmp.ne.s32.totalorder %s294, %s296
      %p303 = scmp.eq.s32.totalorder %s29, 1
      %p304 = por %p302, %p303
      %p305 = scmp.ne.s32.totalorder %s296, %s297
      %p306 = scmp.eq.s32.totalorder %s29, 0
      %p307 = por %p305, %p306
      %p308 = scmp.ne.s32.totalorder %s296, %s297
      %p309 = scmp.eq.s32.totalorder %s30, 1
      %p310 = por %p308, %p309
      %p312 = scmp.ne.s32.totalorder %s297, %s311
      %p313 = scmp.eq.s32.totalorder %s30, 0
      %p314 = por %p312, %p313
      %s316 = sadd.s32 %s315, 1
      %p319 = scmp.eq.s32.totalorder %s24, 1
      %p320 = scmp.ne.s32.totalorder %s315, %s317
      %p321 = scmp.eq.s32.totalorder %s24, 0
      %p322 = por %p320, %p321
      %p323 = scmp.ne.s32.totalorder %s315, %s317
      %p324 = scmp.eq.s32.totalorder %s29, 1
      %p325 = por %p323, %p324
      %p326 = scmp.ne.s32.totalorder %s317, %s318
      %p327 = scmp.eq.s32.totalorder %s29, 0
      %p328 = por %p326, %p327
      %p329 = scmp.ne.s32.totalorder %s317, %s318
      %p330 = scmp.eq.s32.totalorder %s30, 1
      %p331 = por %p329, %p330
      %p333 = scmp.ne.s32.totalorder %s318, %s332
      %p334 = scmp.eq.s32.totalorder %s30, 0
      %p335 = por %p333, %p334
      %s337 = sadd.s32 %s336, 1
      %p340 = scmp.eq.s32.totalorder %s24, 1
      %p341 = scmp.ne.s32.totalorder %s336, %s338
      %p342 = scmp.eq.s32.totalorder %s24, 0
      %p343 = por %p341, %p342
      %p344 = scmp.ne.s32.totalorder %s336, %s338
      %p345 = scmp.eq.s32.totalorder %s29, 1
      %p346 = por %p344, %p345
      %p347 = scmp.ne.s32.totalorder %s338, %s339
      %p348 = scmp.eq.s32.totalorder %s29, 0
      %p349 = por %p347, %p348
      %p350 = scmp.ne.s32.totalorder %s338, %s339
      %p351 = scmp.eq.s32.totalorder %s30, 1
      %p352 = por %p350, %p351
      %p354 = scmp.ne.s32.totalorder %s339, %s353
      %p355 = scmp.eq.s32.totalorder %s30, 0
      %p356 = por %p354, %p355
      %s357 = ssub.s32 %s24, %s31
      %p358 = scmp.eq.s32.totalorder %s357, 0
      %s360 = sadd.s32 %s359, 1
      %s361 = scalar_select %p358, %s359, %s360
      %p364 = pneg %p358
      %p365 = scmp.eq.s32.totalorder %s24, 1
      %p366 = por %p364, %p365
      %p367 = scmp.ne.s32.totalorder %s359, %s362
      %p368 = scmp.eq.s32.totalorder %s24, 0
      %p369 = por %p367, %p368
      %p370 = scmp.ne.s32.totalorder %s359, %s362
      %p371 = scmp.eq.s32.totalorder %s29, 1
      %p372 = por %p370, %p371
      %p373 = scmp.ne.s32.totalorder %s362, %s363
      %p374 = scmp.eq.s32.totalorder %s29, 0
      %p375 = por %p373, %p374
      %p376 = scmp.ne.s32.totalorder %s362, %s363
      %p377 = scmp.eq.s32.totalorder %s30, 1
      %p378 = por %p376, %p377
      %p380 = scmp.ne.s32.totalorder %s363, %s379
      %p381 = scmp.eq.s32.totalorder %s30, 0
      %p382 = por %p380, %p381
      %p383 = scmp.le.s32.totalorder 1, %s24
      %p384 = scmp.lt.s32.totalorder %s24, 3
      %p385 = pnand %p383, %p384
      %p386 = pneg %p385
      // Predicated region
      $region9: #{multinet_forward.1} parent=5 // pred_check
        _
      $region10: #{multinet_forward.1} parent=5 // pred_check_branch
        %388 = sbr.rel (%p385) target = $region12
      $region11: #{multinet_forward.1} parent=5 // pred_region
        %s389 = ssub.s32 %s24, 1
        // Predicated region
        $region13: #{multinet_forward.1} parent=11 // pred_check
          %p390 = pneg %p97
        $region14: #{multinet_forward.1} parent=11 // pred_check_branch
          %392 = sbr.rel (%p390) target = $region16
        $region15: #{multinet_forward.1} parent=11 // pred_region
          _
        $region16: #{multinet_forward.1} parent=11 // pred_fallthru
          _
        // Predicated region
        $region17: #{multinet_forward.1} parent=11 // pred_check
          %p393 = pneg %p118
        $region18: #{multinet_forward.1} parent=11 // pred_check_branch
          %395 = sbr.rel (%p393) target = $region20
        $region19: #{multinet_forward.1} parent=11 // pred_region
          _
        $region20: #{multinet_forward.1} parent=11 // pred_fallthru
          _
        // Predicated region
        $region21: #{multinet_forward.1} parent=11 // pred_check
          %p396 = pneg %p139
        $region22: #{multinet_forward.1} parent=11 // pred_check_branch
          %398 = sbr.rel (%p396) target = $region24
        $region23: #{multinet_forward.1} parent=11 // pred_region
          _
        $region24: #{multinet_forward.1} parent=11 // pred_fallthru
          _
        // Predicated region
        $region25: #{multinet_forward.1} parent=11 // pred_check
          %p399 = pneg %p160
        $region26: #{multinet_forward.1} parent=11 // pred_check_branch
          %401 = sbr.rel (%p399) target = $region28
        $region27: #{multinet_forward.1} parent=11 // pred_region
          _
        $region28: #{multinet_forward.1} parent=11 // pred_fallthru
          _
        // Predicated region
        $region29: #{multinet_forward.1} parent=11 // pred_check
          %p402 = pneg %p181
        $region30: #{multinet_forward.1} parent=11 // pred_check_branch
          %404 = sbr.rel (%p402) target = $region32
        $region31: #{multinet_forward.1} parent=11 // pred_region
          _
        $region32: #{multinet_forward.1} parent=11 // pred_fallthru
          _
        // Predicated region
        $region33: #{multinet_forward.1} parent=11 // pred_check
          %p405 = pneg %p202
        $region34: #{multinet_forward.1} parent=11 // pred_check_branch
          %407 = sbr.rel (%p405) target = $region36
        $region35: #{multinet_forward.1} parent=11 // pred_region
          _
        $region36: #{multinet_forward.1} parent=11 // pred_fallthru
          _
        // Predicated region
        $region37: #{multinet_forward.1} parent=11 // pred_check
          %p408 = pneg %p223
        $region38: #{multinet_forward.1} parent=11 // pred_check_branch
          %410 = sbr.rel (%p408) target = $region40
        $region39: #{multinet_forward.1} parent=11 // pred_region
          _
        $region40: #{multinet_forward.1} parent=11 // pred_fallthru
          _
        // Predicated region
        $region41: #{multinet_forward.1} parent=11 // pred_check
          %p411 = pneg %p244
        $region42: #{multinet_forward.1} parent=11 // pred_check_branch
          %413 = sbr.rel (%p411) target = $region44
        $region43: #{multinet_forward.1} parent=11 // pred_region
          _
        $region44: #{multinet_forward.1} parent=11 // pred_fallthru
          _
        // Predicated region
        $region45: #{multinet_forward.1} parent=11 // pred_check
          %p414 = pneg %p265
        $region46: #{multinet_forward.1} parent=11 // pred_check_branch
          %416 = sbr.rel (%p414) target = $region48
        $region47: #{multinet_forward.1} parent=11 // pred_region
          _
        $region48: #{multinet_forward.1} parent=11 // pred_fallthru
          _
        // Predicated region
        $region49: #{multinet_forward.1} parent=11 // pred_check
          %p417 = pneg %p286
        $region50: #{multinet_forward.1} parent=11 // pred_check_branch
          %419 = sbr.rel (%p417) target = $region52
        $region51: #{multinet_forward.1} parent=11 // pred_region
          _
        $region52: #{multinet_forward.1} parent=11 // pred_fallthru
          _
        // Predicated region
        $region53: #{multinet_forward.1} parent=11 // pred_check
          %p420 = pneg %p307
        $region54: #{multinet_forward.1} parent=11 // pred_check_branch
          %422 = sbr.rel (%p420) target = $region56
        $region55: #{multinet_forward.1} parent=11 // pred_region
          _
        $region56: #{multinet_forward.1} parent=11 // pred_fallthru
          _
        // Predicated region
        $region57: #{multinet_forward.1} parent=11 // pred_check
          %p423 = pneg %p328
        $region58: #{multinet_forward.1} parent=11 // pred_check_branch
          %425 = sbr.rel (%p423) target = $region60
        $region59: #{multinet_forward.1} parent=11 // pred_region
          _
        $region60: #{multinet_forward.1} parent=11 // pred_fallthru
          _
        // Predicated region
        $region61: #{multinet_forward.1} parent=11 // pred_check
          %p426 = pneg %p349
        $region62: #{multinet_forward.1} parent=11 // pred_check_branch
          %428 = sbr.rel (%p426) target = $region64
        $region63: #{multinet_forward.1} parent=11 // pred_region
          _
        $region64: #{multinet_forward.1} parent=11 // pred_fallthru
          _
      $region12: #{multinet_forward.1} parent=5 // pred_fallthru
        _
      %p429 = scmp.lt.s32.totalorder %s24, 2
      // Predicated region
      $region65: #{multinet_forward.1} parent=5 // pred_check
        %p430 = pneg %p429
      $region66: #{multinet_forward.1} parent=5 // pred_check_branch
        %432 = sbr.rel (%p430) target = $region68
      $region67: #{multinet_forward.1} parent=5 // pred_region
        // Predicated region
        $region69: #{multinet_forward.1} parent=67 // pred_check
          %p433 = pneg %p44
        $region70: #{multinet_forward.1} parent=67 // pred_check_branch
          %435 = sbr.rel (%p433) target = $region72
        $region71: #{multinet_forward.1} parent=67 // pred_region
          %p436 = scmp.lt.s32.totalorder %s24, 1
          %s437 = scalar_select %p436, %s24, 1
          %s438 = smul.addr %s437, 9
          %s439 = smul.addr %s438, 8
          %s440 = scalar_lea.vmem %s0, %s439
        $region72: #{multinet_forward.1} parent=67 // pred_fallthru
          _
        // Predicated region
        $region73: #{multinet_forward.1} parent=67 // pred_check
          %p441 = pneg %p70
        $region74: #{multinet_forward.1} parent=67 // pred_check_branch
          %443 = sbr.rel (%p441) target = $region76
        $region75: #{multinet_forward.1} parent=67 // pred_region
          %p444 = scmp.lt.s32.totalorder %s24, 1
          %s445 = scalar_select %p444, %s24, 1
          %s446 = smul.addr %s445, 8
          %s447 = scalar_lea.vmem %s1, %s446
        $region76: #{multinet_forward.1} parent=67 // pred_fallthru
          _
      $region68: #{multinet_forward.1} parent=5 // pred_fallthru
        _
      %p448 = scmp.le.s32.totalorder 1, %s24
      %p449 = scmp.lt.s32.totalorder %s24, 3
      %p450 = pnand %p448, %p449
      %p451 = pneg %p450
      // Predicated region
      $region77: #{multinet_forward.1} parent=5 // pred_check
        _
      $region78: #{multinet_forward.1} parent=5 // pred_check_branch
        %453 = sbr.rel (%p450) target = $region80
      $region79: #{multinet_forward.1} parent=5 // pred_region
        %s454 = ssub.s32 %s24, 1
        %p455 = scmp.lt.s32.totalorder %s29, 1
        %s456 = scalar_select %p455, %s29, 1
        %s457 = smul.addr %s456, 9
        %s458 = smul.addr %s457, 8
        %s459 = scalar_lea.vmem %s0, %s458
        %p460 = pneg %p50
        %p461 = pneg %p47
        %p462 = scmp.lt.s32.totalorder %s29, 1
        %s463 = scalar_select %p462, %s29, 1
        %s464 = smul.addr %s463, 8
        %s465 = scalar_lea.vmem %s1, %s464
        %p466 = pneg %p76
        %p467 = pneg %p73
        %p468 = pneg %p97
        %p469 = pneg %p94
        %p470 = pneg %p118
        %p471 = pneg %p115
        %p472 = pneg %p139
        %p473 = pneg %p136
        %p474 = pneg %p160
        %p475 = pneg %p157
        %p476 = pneg %p181
        %p477 = pneg %p178
        %p478 = pneg %p202
        %p479 = pneg %p199
        %p480 = pneg %p223
        %p481 = pneg %p220
        %p482 = pneg %p244
        %p483 = pneg %p241
        %p484 = pneg %p265
        %p485 = pneg %p262
        %p486 = pneg %p286
        %p487 = pneg %p283
        %p488 = pneg %p307
        %p489 = pneg %p304
        %p490 = pneg %p328
        %p491 = pneg %p325
        %p492 = pneg %p349
        %p493 = pneg %p346
        %p494 = pneg %p375
        %p495 = pneg %p372
        %s496 = sand.u32 %s362, 1
        %s497 = scalar_lea.sflag [#allocation3], %s496
        %s498 = sand.u32 %s362, 1
        %s499 = scalar_lea.vmem [#allocation2], %s498
        %p500 = scmp.lt.s32.totalorder %s29, 1
        %s501 = scalar_select %p500, %s29, 1
        %s502 = smul.addr %s501, 9
        %s503 = smul.addr %s502, 8
        %s504 = scalar_lea.vmem %s0, %s503
        %p505 = scmp.lt.s32.totalorder %s29, 1
        %s506 = scalar_select %p505, %s29, 1
        %s507 = smul.addr %s506, 8
        %s508 = scalar_lea.vmem %s1, %s507
        %v509 = vld [vmem:[%s504] sm:$0xff]
        %v510 = vld [vmem:[%s504 + $0x8] sm:$0xff]
        %v511 = vld [vmem:[%s504 + $0x10] sm:$0xff]
        %v512 = vld [vmem:[%s504 + $0x18] sm:$0xff]
        %v513 = vld [vmem:[%s504 + $0x20] sm:$0xff]
        %v514 = vld [vmem:[%s504 + $0x28] sm:$0xff]
        %v515 = vld [vmem:[%s504 + $0x30] sm:$0xff]
        %v516 = vld [vmem:[%s504 + $0x38] sm:$0xff]
        %v517 = vld [vmem:[%s504 + $0x40] sm:$0x7]
        %vm526 = vcmask 1046528
        %v527 = vrot.slane %v509, 1
        %v528 = vrot.slane %v510, 1
        %v529 = vsel %vm526, %v527, %v528
        %v530 = vrot.slane %v511, 1
        %v531 = vsel %vm526, %v528, %v530
        %v532 = vrot.slane %v512, 1
        %v533 = vsel %vm526, %v530, %v532
        %v534 = vrot.slane %v513, 1
        %v535 = vsel %vm526, %v532, %v534
        %v536 = vrot.slane %v514, 1
        %v537 = vsel %vm526, %v534, %v536
        %v538 = vrot.slane %v515, 1
        %v539 = vsel %vm526, %v536, %v538
        %v540 = vrot.slane %v516, 1
        %v541 = vsel %vm526, %v538, %v540
        %542 = vrot.lane.b32.xlu0 %v529, 32
        %v543 = vpop.permute.xlu0 %542
        %544 = vrot.lane.b32.xlu0 %v531, 32
        %v545 = vpop.permute.xlu0 %544
        %546 = vrot.lane.b32.xlu0 %v533, 32
        %v547 = vpop.permute.xlu0 %546
        %548 = vrot.lane.b32.xlu0 %v535, 32
        %v549 = vpop.permute.xlu0 %548
        %550 = vrot.lane.b32.xlu0 %v537, 32
        %v551 = vpop.permute.xlu0 %550
        %552 = vrot.lane.b32.xlu0 %v539, 32
        %v553 = vpop.permute.xlu0 %552
        %554 = vrot.lane.b32.xlu0 %v541, 32
        %v555 = vpop.permute.xlu0 %554
        %556 = vrot.lane.b32.xlu0 %v540, 32
        %v557 = vpop.permute.xlu0 %556
        %vm566 = vcmask 1045504
        %v567 = vrot.slane %v509, 2
        %v568 = vrot.slane %v510, 2
        %v569 = vsel %vm566, %v567, %v568
        %v570 = vrot.slane %v511, 2
        %v571 = vsel %vm566, %v568, %v570
        %v572 = vrot.slane %v512, 2
        %v573 = vsel %vm566, %v570, %v572
        %v574 = vrot.slane %v513, 2
        %v575 = vsel %vm566, %v572, %v574
        %v576 = vrot.slane %v514, 2
        %v577 = vsel %vm566, %v574, %v576
        %v578 = vrot.slane %v515, 2
        %v579 = vsel %vm566, %v576, %v578
        %v580 = vrot.slane %v516, 2
        %v581 = vsel %vm566, %v578, %v580
        %582 = vrot.lane.b32.xlu0 %v569, 64
        %v583 = vpop.permute.xlu0 %582
        %584 = vrot.lane.b32.xlu0 %v571, 64
        %v585 = vpop.permute.xlu0 %584
        %586 = vrot.lane.b32.xlu0 %v573, 64
        %v587 = vpop.permute.xlu0 %586
        %588 = vrot.lane.b32.xlu0 %v575, 64
        %v589 = vpop.permute.xlu0 %588
        %590 = vrot.lane.b32.xlu0 %v577, 64
        %v591 = vpop.permute.xlu0 %590
        %592 = vrot.lane.b32.xlu0 %v579, 64
        %v593 = vpop.permute.xlu0 %592
        %594 = vrot.lane.b32.xlu0 %v581, 64
        %v595 = vpop.permute.xlu0 %594
        %596 = vrot.lane.b32.xlu0 %v580, 64
        %v597 = vpop.permute.xlu0 %596
        %vm606 = vcmask 1044480
        %v607 = vrot.slane %v509, 3
        %v608 = vrot.slane %v510, 3
        %v609 = vsel %vm606, %v607, %v608
        %v610 = vrot.slane %v511, 3
        %v611 = vsel %vm606, %v608, %v610
        %v612 = vrot.slane %v512, 3
        %v613 = vsel %vm606, %v610, %v612
        %v614 = vrot.slane %v513, 3
        %v615 = vsel %vm606, %v612, %v614
        %v616 = vrot.slane %v514, 3
        %v617 = vsel %vm606, %v614, %v616
        %v618 = vrot.slane %v515, 3
        %v619 = vsel %vm606, %v616, %v618
        %v620 = vrot.slane %v516, 3
        %v621 = vsel %vm606, %v618, %v620
        %622 = vrot.lane.b32.xlu0 %v609, 96
        %v623 = vpop.permute.xlu0 %622
        %624 = vrot.lane.b32.xlu0 %v611, 96
        %v625 = vpop.permute.xlu0 %624
        %626 = vrot.lane.b32.xlu0 %v613, 96
        %v627 = vpop.permute.xlu0 %626
        %628 = vrot.lane.b32.xlu0 %v615, 96
        %v629 = vpop.permute.xlu0 %628
        %630 = vrot.lane.b32.xlu0 %v617, 96
        %v631 = vpop.permute.xlu0 %630
        %632 = vrot.lane.b32.xlu0 %v619, 96
        %v633 = vpop.permute.xlu0 %632
        %634 = vrot.lane.b32.xlu0 %v621, 96
        %v635 = vpop.permute.xlu0 %634
        %636 = vrot.lane.b32.xlu0 %v620, 96
        %v637 = vpop.permute.xlu0 %636
        %vm646 = vcmask 1043456
        %v647 = vrot.slane %v509, 4
        %v648 = vrot.slane %v510, 4
        %v649 = vsel %vm646, %v647, %v648
        %v650 = vrot.slane %v511, 4
        %v651 = vsel %vm646, %v648, %v650
        %v652 = vrot.slane %v512, 4
        %v653 = vsel %vm646, %v650, %v652
        %v654 = vrot.slane %v513, 4
        %v655 = vsel %vm646, %v652, %v654
        %v656 = vrot.slane %v514, 4
        %v657 = vsel %vm646, %v654, %v656
        %v658 = vrot.slane %v515, 4
        %v659 = vsel %vm646, %v656, %v658
        %v660 = vrot.slane %v516, 4
        %v661 = vsel %vm646, %v658, %v660
        %vm671 = vcmask 1042432
        %v672 = vrot.slane %v509, 5
        %v673 = vrot.slane %v510, 5
        %v674 = vsel %vm671, %v672, %v673
        %v675 = vrot.slane %v511, 5
        %v676 = vsel %vm671, %v673, %v675
        %v677 = vrot.slane %v512, 5
        %v678 = vsel %vm671, %v675, %v677
        %v679 = vrot.slane %v513, 5
        %v680 = vsel %vm671, %v677, %v679
        %v681 = vrot.slane %v514, 5
        %v682 = vsel %vm671, %v679, %v681
        %v683 = vrot.slane %v515, 5
        %v684 = vsel %vm671, %v681, %v683
        %v685 = vrot.slane %v516, 5
        %v686 = vsel %vm671, %v683, %v685
        %v687 = vrot.slane %v517, 5
        %v688 = vsel %vm671, %v685, %v687
        %689 = vrot.lane.b32.xlu0 %v674, 32
        %v690 = vpop.permute.xlu0 %689
        %691 = vrot.lane.b32.xlu0 %v676, 32
        %v692 = vpop.permute.xlu0 %691
        %693 = vrot.lane.b32.xlu0 %v678, 32
        %v694 = vpop.permute.xlu0 %693
        %695 = vrot.lane.b32.xlu0 %v680, 32
        %v696 = vpop.permute.xlu0 %695
        %697 = vrot.lane.b32.xlu0 %v682, 32
        %v698 = vpop.permute.xlu0 %697
        %699 = vrot.lane.b32.xlu0 %v684, 32
        %v700 = vpop.permute.xlu0 %699
        %701 = vrot.lane.b32.xlu0 %v686, 32
        %v702 = vpop.permute.xlu0 %701
        %703 = vrot.lane.b32.xlu0 %v688, 32
        %v704 = vpop.permute.xlu0 %703
        %vm713 = vcmask 1041408
        %v714 = vrot.slane %v509, 6
        %v715 = vrot.slane %v510, 6
        %v716 = vsel %vm713, %v714, %v715
        %v717 = vrot.slane %v511, 6
        %v718 = vsel %vm713, %v715, %v717
        %v719 = vrot.slane %v512, 6
        %v720 = vsel %vm713, %v717, %v719
        %v721 = vrot.slane %v513, 6
        %v722 = vsel %vm713, %v719, %v721
        %v723 = vrot.slane %v514, 6
        %v724 = vsel %vm713, %v721, %v723
        %v725 = vrot.slane %v515, 6
        %v726 = vsel %vm713, %v723, %v725
        %v727 = vrot.slane %v516, 6
        %v728 = vsel %vm713, %v725, %v727
        %v729 = vrot.slane %v517, 6
        %v730 = vsel %vm713, %v727, %v729
        %731 = vrot.lane.b32.xlu0 %v716, 64
        %v732 = vpop.permute.xlu0 %731
        %733 = vrot.lane.b32.xlu0 %v718, 64
        %v734 = vpop.permute.xlu0 %733
        %735 = vrot.lane.b32.xlu0 %v720, 64
        %v736 = vpop.permute.xlu0 %735
        %737 = vrot.lane.b32.xlu0 %v722, 64
        %v738 = vpop.permute.xlu0 %737
        %739 = vrot.lane.b32.xlu0 %v724, 64
        %v740 = vpop.permute.xlu0 %739
        %741 = vrot.lane.b32.xlu0 %v726, 64
        %v742 = vpop.permute.xlu0 %741
        %743 = vrot.lane.b32.xlu0 %v728, 64
        %v744 = vpop.permute.xlu0 %743
        %745 = vrot.lane.b32.xlu0 %v730, 64
        %v746 = vpop.permute.xlu0 %745
        %vm755 = vcmask 1040384
        %v756 = vrot.slane %v509, 7
        %v757 = vrot.slane %v510, 7
        %v758 = vsel %vm755, %v756, %v757
        %v759 = vrot.slane %v511, 7
        %v760 = vsel %vm755, %v757, %v759
        %v761 = vrot.slane %v512, 7
        %v762 = vsel %vm755, %v759, %v761
        %v763 = vrot.slane %v513, 7
        %v764 = vsel %vm755, %v761, %v763
        %v765 = vrot.slane %v514, 7
        %v766 = vsel %vm755, %v763, %v765
        %v767 = vrot.slane %v515, 7
        %v768 = vsel %vm755, %v765, %v767
        %v769 = vrot.slane %v516, 7
        %v770 = vsel %vm755, %v767, %v769
        %v771 = vrot.slane %v517, 7
        %v772 = vsel %vm755, %v769, %v771
        %773 = vrot.lane.b32.xlu0 %v758, 96
        %v774 = vpop.permute.xlu0 %773
        %775 = vrot.lane.b32.xlu0 %v760, 96
        %v776 = vpop.permute.xlu0 %775
        %777 = vrot.lane.b32.xlu0 %v762, 96
        %v778 = vpop.permute.xlu0 %777
        %779 = vrot.lane.b32.xlu0 %v764, 96
        %v780 = vpop.permute.xlu0 %779
        %781 = vrot.lane.b32.xlu0 %v766, 96
        %v782 = vpop.permute.xlu0 %781
        %783 = vrot.lane.b32.xlu0 %v768, 96
        %v784 = vpop.permute.xlu0 %783
        %785 = vrot.lane.b32.xlu0 %v770, 96
        %v786 = vpop.permute.xlu0 %785
        %787 = vrot.lane.b32.xlu0 %v772, 96
        %v788 = vpop.permute.xlu0 %787
        %vm797 = vcmask 261120
        %v798 = vsel %vm797, %v509, %v543
        %v799 = vsel %vm797, %v510, %v545
        %v800 = vsel %vm797, %v511, %v547
        %v801 = vsel %vm797, %v512, %v549
        %v802 = vsel %vm797, %v513, %v551
        %v803 = vsel %vm797, %v514, %v553
        %v804 = vsel %vm797, %v515, %v555
        %v805 = vsel %vm797, %v516, %v557
        %vm806 = vcmask 523264
        %v807 = vsel %vm806, %v798, %v583
        %v808 = vsel %vm806, %v799, %v585
        %v809 = vsel %vm806, %v800, %v587
        %v810 = vsel %vm806, %v801, %v589
        %v811 = vsel %vm806, %v802, %v591
        %v812 = vsel %vm806, %v803, %v593
        %v813 = vsel %vm806, %v804, %v595
        %v814 = vsel %vm806, %v805, %v597
        %vm815 = vcmask 785408
        %v816 = vsel %vm815, %v807, %v623
        %v817 = vsel %vm815, %v808, %v625
        %v818 = vsel %vm815, %v809, %v627
        %v819 = vsel %vm815, %v810, %v629
        %v820 = vsel %vm815, %v811, %v631
        %v821 = vsel %vm815, %v812, %v633
        %v822 = vsel %vm815, %v813, %v635
        %v823 = vsel %vm815, %v814, %v637
        %v824 = vsel %vm797, %v649, %v690
        %v825 = vsel %vm797, %v651, %v692
        %v826 = vsel %vm797, %v653, %v694
        %v827 = vsel %vm797, %v655, %v696
        %v828 = vsel %vm797, %v657, %v698
        %v829 = vsel %vm797, %v659, %v700
        %v830 = vsel %vm797, %v661, %v702
        %v831 = vsel %vm797, %v660, %v704
        %v832 = vsel %vm806, %v824, %v732
        %v833 = vsel %vm806, %v825, %v734
        %v834 = vsel %vm806, %v826, %v736
        %v835 = vsel %vm806, %v827, %v738
        %v836 = vsel %vm806, %v828, %v740
        %v837 = vsel %vm806, %v829, %v742
        %v838 = vsel %vm806, %v830, %v744
        %v839 = vsel %vm806, %v831, %v746
        %v840 = vsel %vm815, %v832, %v774
        %v841 = vsel %vm815, %v833, %v776
        %v842 = vsel %vm815, %v834, %v778
        %v843 = vsel %vm815, %v835, %v780
        %v844 = vsel %vm815, %v836, %v782
        %v845 = vsel %vm815, %v837, %v784
        %v846 = vsel %vm815, %v838, %v786
        %v847 = vsel %vm815, %v839, %v788
        %v848 = vld [vmem:[%s2] sm:$0xff]
        %v849 = vld [vmem:[%s2 + $0x8] sm:$0xff]
        %v850 = vld [vmem:[%s2 + $0x10] sm:$0xff]
        %v851 = vld [vmem:[%s2 + $0x18] sm:$0xff]
        %v852 = vld [vmem:[%s2 + $0x20] sm:$0xff]
        %v853 = vld [vmem:[%s2 + $0x28] sm:$0xff]
        %v854 = vld [vmem:[%s2 + $0x30] sm:$0xff]
        %v855 = vld [vmem:[%s2 + $0x38] sm:$0xff]
        %v856 = vld [vmem:[%s2 + $0x40] sm:$0xff]
        %v857 = vld [vmem:[%s2 + $0x48] sm:$0xff]
        %v858 = vld [vmem:[%s2 + $0x50] sm:$0xff]
        %v859 = vld [vmem:[%s2 + $0x58] sm:$0xff]
        %v860 = vld [vmem:[%s2 + $0x60] sm:$0xff]
        %v861 = vld [vmem:[%s2 + $0x68] sm:$0xff]
        %v862 = vld [vmem:[%s2 + $0x70] sm:$0xff]
        %v863 = vld [vmem:[%s2 + $0x78] sm:$0xff]
        %v864 = vld [vmem:[%s2 + $0x80] sm:$0xff]
        %v865 = vld [vmem:[%s2 + $0x88] sm:$0xff]
        %v866 = vld [vmem:[%s2 + $0x90] sm:$0xff]
        %v867 = vld [vmem:[%s2 + $0x98] sm:$0xff]
        %v868 = vld [vmem:[%s2 + $0xa0] sm:$0xff]
        %v869 = vld [vmem:[%s2 + $0xa8] sm:$0xff]
        %v870 = vld [vmem:[%s2 + $0xb0] sm:$0xff]
        %v871 = vld [vmem:[%s2 + $0xb8] sm:$0xff]
        %v872 = vld [vmem:[%s2 + $0xc0] sm:$0xff]
        %v873 = vld [vmem:[%s2 + $0xc8] sm:$0xff]
        %v874 = vld [vmem:[%s2 + $0xd0] sm:$0xff]
        %v875 = vld [vmem:[%s2 + $0xd8] sm:$0xff]
        %v876 = vld [vmem:[%s2 + $0xe0] sm:$0xff]
        %v877 = vld [vmem:[%s2 + $0xe8] sm:$0xff]
        %v878 = vld [vmem:[%s2 + $0xf0] sm:$0xff]
        %v879 = vld [vmem:[%s2 + $0xf8] sm:$0xff]
        %v880 = vld [vmem:[%s3] sm:$0x1]
        %v882 = vlaneseq
        %v883 = vshrl.u32 %v882, 7
        %v884 = vsub.s32 0, %v883
        %v885 = vrot.slane %v880, %v884
        %887 = vmatprep.subr.mxu0 0.0
        %888 = vmatpush1.msra.mxu0 %v848
        %889 = vmatprep.subr.mxu0 0.0
        %890 = vmatpush1.msra.mxu0 %v849
        %891 = vmatprep.subr.mxu0 0.0
        %892 = vmatpush1.msra.mxu0 %v850
        %893 = vmatprep.subr.mxu0 0.0
        %894 = vmatpush1.msra.mxu0 %v851
        %895 = vmatprep.subr.mxu0 0.0
        %896 = vmatpush1.msra.mxu0 %v852
        %897 = vmatprep.subr.mxu0 0.0
        %898 = vmatpush1.msra.mxu0 %v853
        %899 = vmatprep.subr.mxu0 0.0
        %900 = vmatpush1.msra.mxu0 %v854
        %901 = vmatprep.subr.mxu0 0.0
        %902 = vmatpush1.msra.mxu0 %v855
        %903 = vmatprep.subr.mxu0 0.0
        %904 = vmatpush1.msra.mxu0 %v856
        %905 = vmatprep.subr.mxu0 0.0
        %906 = vmatpush1.msra.mxu0 %v857
        %907 = vmatprep.subr.mxu0 0.0
        %908 = vmatpush1.msra.mxu0 %v858
        %909 = vmatprep.subr.mxu0 0.0
        %910 = vmatpush1.msra.mxu0 %v859
        %911 = vmatprep.subr.mxu0 0.0
        %912 = vmatpush1.msra.mxu0 %v860
        %913 = vmatprep.subr.mxu0 0.0
        %914 = vmatpush1.msra.mxu0 %v861
        %915 = vmatprep.subr.mxu0 0.0
        %916 = vmatpush1.msra.mxu0 %v862
        %917 = vmatprep.subr.mxu0 0.0
        %918 = vmatpush1.msra.mxu0 %v863
        %919 = vmatprep.subr.mxu0 0.0
        %920 = vmatpush1.msra.mxu0 %v864
        %921 = vmatprep.subr.mxu0 0.0
        %922 = vmatpush1.msra.mxu0 %v865
        %923 = vmatprep.subr.mxu0 0.0
        %924 = vmatpush1.msra.mxu0 %v866
        %925 = vmatprep.subr.mxu0 0.0
        %926 = vmatpush1.msra.mxu0 %v867
        %927 = vmatprep.subr.mxu0 0.0
        %928 = vmatpush1.msra.mxu0 %v868
        %929 = vmatprep.subr.mxu0 0.0
        %930 = vmatpush1.msra.mxu0 %v869
        %931 = vmatprep.subr.mxu0 0.0
        %932 = vmatpush1.msra.mxu0 %v870
        %933 = vmatprep.subr.mxu0 0.0
        %934 = vmatpush1.msra.mxu0 %v871
        %935 = vmatprep.subr.mxu0 0.0
        %936 = vmatpush1.msra.mxu0 %v872
        %937 = vmatprep.subr.mxu0 0.0
        %938 = vmatpush1.msra.mxu0 %v873
        %939 = vmatprep.subr.mxu0 0.0
        %940 = vmatpush1.msra.mxu0 %v874
        %941 = vmatprep.subr.mxu0 0.0
        %942 = vmatpush1.msra.mxu0 %v875
        %943 = vmatprep.subr.mxu0 0.0
        %944 = vmatpush1.msra.mxu0 %v876
        %945 = vmatprep.subr.mxu0 0.0
        %946 = vmatpush1.msra.mxu0 %v877
        %947 = vmatprep.subr.mxu0 0.0
        %948 = vmatpush1.msra.mxu0 %v878
        %949 = vmatprep.subr.mxu0 0.0
        %950 = vmatpush1.msra.mxu0 %v879
        %951 = vmatprep.mubr.f32.mxu0 %v840
        %952 = vmatmul.mubr.f32.gmra.mrb[0].mxu0 %v816
        %v953 = vpop.f32.mrb[0].mxu0
        %v954 = vadd.f32 %v885, %v953
        %v955 = vpop.f32.mrb[0].mxu0
        %956 = vmatprep.mubr.f32.mxu0 %v841
        %957 = vmatmul.mubr.f32.gmra.mrb[0].mxu0 %v817
        %v958 = vpop.f32.mrb[0].mxu0
        %v959 = vadd.f32 %v885, %v958
        %v960 = vpop.f32.mrb[0].mxu0
        %961 = vmatprep.mubr.f32.mxu0 %v842
        %962 = vmatmul.mubr.f32.gmra.mrb[0].mxu0 %v818
        %v963 = vpop.f32.mrb[0].mxu0
        %v964 = vadd.f32 %v885, %v963
        %v965 = vpop.f32.mrb[0].mxu0
        %966 = vmatprep.mubr.f32.mxu0 %v843
        %967 = vmatmul.mubr.f32.gmra.mrb[0].mxu0 %v819
        %v968 = vpop.f32.mrb[0].mxu0
        %v969 = vadd.f32 %v885, %v968
        %v970 = vpop.f32.mrb[0].mxu0
        %971 = vmatprep.mubr.f32.mxu0 %v844
        %972 = vmatmul.mubr.f32.gmra.mrb[0].mxu0 %v820
        %v973 = vpop.f32.mrb[0].mxu0
        %v974 = vadd.f32 %v885, %v973
        %v975 = vpop.f32.mrb[0].mxu0
        %976 = vmatprep.mubr.f32.mxu0 %v845
        %977 = vmatmul.mubr.f32.gmra.mrb[0].mxu0 %v821
        %v978 = vpop.f32.mrb[0].mxu0
        %v979 = vadd.f32 %v885, %v978
        %v980 = vpop.f32.mrb[0].mxu0
        %981 = vmatprep.mubr.f32.mxu0 %v846
        %982 = vmatmul.mubr.f32.gmra.mrb[0].mxu0 %v822
        %v983 = vpop.f32.mrb[0].mxu0
        %v984 = vadd.f32 %v885, %v983
        %v985 = vpop.f32.mrb[0].mxu0
        %986 = vmatprep.mubr.f32.mxu0 %v847
        %987 = vmatmul.mubr.f32.gmra.mrb[0].mxu0 %v823
        %v988 = vpop.f32.mrb[0].mxu0
        %v989 = vadd.f32 %v885, %v988
        %v990 = vpop.f32.mrb[0].mxu0
        %991 = vdwg.mxu0
        %v1000 = vrot.slane %v954, 1
        %v1001 = vrot.slane %v959, 1
        %v1002 = vsel %vm526, %v1000, %v1001
        %v1003 = vrot.slane %v964, 1
        %v1004 = vsel %vm526, %v1001, %v1003
        %v1005 = vrot.slane %v969, 1
        %v1006 = vsel %vm526, %v1003, %v1005
        %v1007 = vrot.slane %v974, 1
        %v1008 = vsel %vm526, %v1005, %v1007
        %v1009 = vrot.slane %v979, 1
        %v1010 = vsel %vm526, %v1007, %v1009
        %v1011 = vrot.slane %v984, 1
        %v1012 = vsel %vm526, %v1009, %v1011
        %v1013 = vrot.slane %v989, 1
        %v1014 = vsel %vm526, %v1011, %v1013
        %v1023 = vmax.f32 %v954, %v1002
        %v1024 = vmax.f32 %v959, %v1004
        %v1025 = vmax.f32 %v964, %v1006
        %v1026 = vmax.f32 %v969, %v1008
        %v1027 = vmax.f32 %v974, %v1010
        %v1028 = vmax.f32 %v979, %v1012
        %v1029 = vmax.f32 %v984, %v1014
        %v1030 = vmax.f32 %v989, %v1013
        %v1031 = vrot.slane %v954, 2
        %v1032 = vrot.slane %v959, 2
        %v1033 = vsel %vm566, %v1031, %v1032
        %v1034 = vrot.slane %v964, 2
        %v1035 = vsel %vm566, %v1032, %v1034
        %v1036 = vrot.slane %v969, 2
        %v1037 = vsel %vm566, %v1034, %v1036
        %v1038 = vrot.slane %v974, 2
        %v1039 = vsel %vm566, %v1036, %v1038
        %v1040 = vrot.slane %v979, 2
        %v1041 = vsel %vm566, %v1038, %v1040
        %v1042 = vrot.slane %v984, 2
        %v1043 = vsel %vm566, %v1040, %v1042
        %v1044 = vrot.slane %v989, 2
        %v1045 = vsel %vm566, %v1042, %v1044
        %v1054 = vmax.f32 %v1023, %v1033
        %v1055 = vmax.f32 %v1024, %v1035
        %v1056 = vmax.f32 %v1025, %v1037
        %v1057 = vmax.f32 %v1026, %v1039
        %v1058 = vmax.f32 %v1027, %v1041
        %v1059 = vmax.f32 %v1028, %v1043
        %v1060 = vmax.f32 %v1029, %v1045
        %v1061 = vmax.f32 %v1030, %v1044
        %v1062 = vrot.slane %v954, 3
        %v1063 = vrot.slane %v959, 3
        %v1064 = vsel %vm606, %v1062, %v1063
        %v1065 = vrot.slane %v964, 3
        %v1066 = vsel %vm606, %v1063, %v1065
        %v1067 = vrot.slane %v969, 3
        %v1068 = vsel %vm606, %v1065, %v1067
        %v1069 = vrot.slane %v974, 3
        %v1070 = vsel %vm606, %v1067, %v1069
        %v1071 = vrot.slane %v979, 3
        %v1072 = vsel %vm606, %v1069, %v1071
        %v1073 = vrot.slane %v984, 3
        %v1074 = vsel %vm606, %v1071, %v1073
        %v1075 = vrot.slane %v989, 3
        %v1076 = vsel %vm606, %v1073, %v1075
        %v1085 = vmax.f32 %v1054, %v1064
        %v1086 = vmax.f32 %v1055, %v1066
        %v1087 = vmax.f32 %v1056, %v1068
        %v1088 = vmax.f32 %v1057, %v1070
        %v1089 = vmax.f32 %v1058, %v1072
        %v1090 = vmax.f32 %v1059, %v1074
        %v1091 = vmax.f32 %v1060, %v1076
        %v1092 = vmax.f32 %v1061, %v1075
        %v1094 = vrot.slane %v1085, 3
        %v1097 = vrot.slane %v1086, 6
        %v1099 = vrot.slane %v1086, 1
        %v1102 = vrot.slane %v1087, 4
        %v1104 = vrot.slane %v1087, 7
        %v1107 = vrot.slane %v1088, 2
        %v1109 = vrot.slane %v1088, 5
        %v1112 = vrot.slane %v1089, 3
        %v1115 = vrot.slane %v1090, 6
        %v1117 = vrot.slane %v1090, 1
        %v1120 = vrot.slane %v1091, 4
        %v1122 = vrot.slane %v1091, 7
        %v1125 = vrot.slane %v1092, 2
        %v1127 = vsel %vm755, %v1085, %v1094
        %v1128 = vsel %vm713, %v1127, %v1097
        %v1129 = vsel %vm671, %v1128, %v1099
        %v1130 = vsel %vm646, %v1129, %v1102
        %v1131 = vsel %vm606, %v1130, %v1104
        %v1132 = vsel %vm566, %v1131, %v1107
        %v1133 = vsel %vm526, %v1132, %v1109
        %v1134 = vsel %vm755, %v1089, %v1112
        %v1135 = vsel %vm713, %v1134, %v1115
        %v1136 = vsel %vm671, %v1135, %v1117
        %v1137 = vsel %vm646, %v1136, %v1120
        %v1138 = vsel %vm606, %v1137, %v1122
        %v1139 = vsel %vm566, %v1138, %v1125
        %v1142 = vrot.slane %v1133, 1
        %v1143 = vrot.slane %v1139, 1
        %v1144 = vsel %vm526, %v1142, %v1143
        %1145 = vrot.lane.b32.xlu0 %v1144, 32
        %v1146 = vpop.permute.xlu0 %1145
        %v1148 = vrot.slane %v1133, 2
        %v1149 = vrot.slane %v1139, 2
        %v1150 = vsel %vm566, %v1148, %v1149
        %1151 = vrot.lane.b32.xlu0 %v1150, 64
        %v1152 = vpop.permute.xlu0 %1151
        %v1154 = vrot.slane %v1133, 3
        %v1155 = vrot.slane %v1139, 3
        %v1156 = vsel %vm606, %v1154, %v1155
        %1157 = vrot.lane.b32.xlu0 %v1156, 96
        %v1158 = vpop.permute.xlu0 %1157
        %v1160 = vrot.slane %v1133, 4
        %v1161 = vrot.slane %v1139, 4
        %v1162 = vsel %vm646, %v1160, %v1161
        %v1164 = vrot.slane %v1133, 5
        %v1165 = vrot.slane %v1139, 5
        %v1166 = vsel %vm671, %v1164, %v1165
        %1167 = vrot.lane.b32.xlu0 %v1166, 32
        %v1168 = vpop.permute.xlu0 %1167
        %v1170 = vrot.slane %v1133, 6
        %v1171 = vrot.slane %v1139, 6
        %v1172 = vsel %vm713, %v1170, %v1171
        %1173 = vrot.lane.b32.xlu0 %v1172, 64
        %v1174 = vpop.permute.xlu0 %1173
        %v1176 = vrot.slane %v1133, 7
        %v1177 = vrot.slane %v1139, 7
        %v1178 = vsel %vm755, %v1176, %v1177
        %1179 = vrot.lane.b32.xlu0 %v1178, 96
        %v1180 = vpop.permute.xlu0 %1179
        %v1182 = vsel %vm797, %v1133, %v1146
        %v1183 = vsel %vm806, %v1182, %v1152
        %v1184 = vsel %vm815, %v1183, %v1158
        %v1185 = vsel %vm797, %v1162, %v1168
        %v1186 = vsel %vm806, %v1185, %v1174
        %v1187 = vsel %vm815, %v1186, %v1180
        %v1188 = vld [vmem:[%s4] sm:$0xff]
        %v1189 = vld [vmem:[%s4 + $0x8] sm:$0xff]
        %v1190 = vld [vmem:[%s4 + $0x10] sm:$0xff]
        %v1191 = vld [vmem:[%s4 + $0x18] sm:$0xff]
        %v1192 = vld [vmem:[%s4 + $0x20] sm:$0xff]
        %v1193 = vld [vmem:[%s4 + $0x28] sm:$0xff]
        %v1194 = vld [vmem:[%s4 + $0x30] sm:$0xff]
        %v1195 = vld [vmem:[%s4 + $0x38] sm:$0xff]
        %v1196 = vld [vmem:[%s4 + $0x40] sm:$0xff]
        %v1197 = vld [vmem:[%s4 + $0x48] sm:$0xff]
        %v1198 = vld [vmem:[%s4 + $0x50] sm:$0xff]
        %v1199 = vld [vmem:[%s4 + $0x58] sm:$0xff]
        %v1200 = vld [vmem:[%s4 + $0x60] sm:$0xff]
        %v1201 = vld [vmem:[%s4 + $0x68] sm:$0xff]
        %v1202 = vld [vmem:[%s4 + $0x70] sm:$0xff]
        %v1203 = vld [vmem:[%s4 + $0x78] sm:$0xff]
        %v1204 = vld [vmem:[%s4 + $0x80] sm:$0xff]
        %v1205 = vld [vmem:[%s4 + $0x88] sm:$0xff]
        %v1206 = vld [vmem:[%s4 + $0x90] sm:$0xff]
        %v1207 = vld [vmem:[%s4 + $0x98] sm:$0xff]
        %v1208 = vld [vmem:[%s4 + $0xa0] sm:$0xff]
        %v1209 = vld [vmem:[%s4 + $0xa8] sm:$0xff]
        %v1210 = vld [vmem:[%s4 + $0xb0] sm:$0xff]
        %v1211 = vld [vmem:[%s4 + $0xb8] sm:$0xff]
        %v1212 = vld [vmem:[%s4 + $0xc0] sm:$0xff]
        %v1213 = vld [vmem:[%s4 + $0xc8] sm:$0xff]
        %v1214 = vld [vmem:[%s4 + $0xd0] sm:$0xff]
        %v1215 = vld [vmem:[%s4 + $0xd8] sm:$0xff]
        %v1216 = vld [vmem:[%s4 + $0xe0] sm:$0xff]
        %v1217 = vld [vmem:[%s4 + $0xe8] sm:$0xff]
        %v1218 = vld [vmem:[%s4 + $0xf0] sm:$0xff]
        %v1219 = vld [vmem:[%s4 + $0xf8] sm:$0xff]
        %v1220 = vld [vmem:[%s5] sm:$0x1]
        %v1222 = vlaneseq
        %v1223 = vshrl.u32 %v1222, 7
        %v1224 = vsub.s32 0, %v1223
        %v1225 = vrot.slane %v1220, %v1224
        %1227 = vmatprep.subr.mxu0 0.0
        %1228 = vmatpush1.msra.mxu0 %v1188
        %1229 = vmatprep.subr.mxu0 0.0
        %1230 = vmatpush1.msra.mxu0 %v1189
        %1231 = vmatprep.subr.mxu0 0.0
        %1232 = vmatpush1.msra.mxu0 %v1190
        %1233 = vmatprep.subr.mxu0 0.0
        %1234 = vmatpush1.msra.mxu0 %v1191
        %1235 = vmatprep.subr.mxu0 0.0
        %1236 = vmatpush1.msra.mxu0 %v1192
        %1237 = vmatprep.subr.mxu0 0.0
        %1238 = vmatpush1.msra.mxu0 %v1193
        %1239 = vmatprep.subr.mxu0 0.0
        %1240 = vmatpush1.msra.mxu0 %v1194
        %1241 = vmatprep.subr.mxu0 0.0
        %1242 = vmatpush1.msra.mxu0 %v1195
        %1243 = vmatprep.subr.mxu0 0.0
        %1244 = vmatpush1.msra.mxu0 %v1196
        %1245 = vmatprep.subr.mxu0 0.0
        %1246 = vmatpush1.msra.mxu0 %v1197
        %1247 = vmatprep.subr.mxu0 0.0
        %1248 = vmatpush1.msra.mxu0 %v1198
        %1249 = vmatprep.subr.mxu0 0.0
        %1250 = vmatpush1.msra.mxu0 %v1199
        %1251 = vmatprep.subr.mxu0 0.0
        %1252 = vmatpush1.msra.mxu0 %v1200
        %1253 = vmatprep.subr.mxu0 0.0
        %1254 = vmatpush1.msra.mxu0 %v1201
        %1255 = vmatprep.subr.mxu0 0.0
        %1256 = vmatpush1.msra.mxu0 %v1202
        %1257 = vmatprep.subr.mxu0 0.0
        %1258 = vmatpush1.msra.mxu0 %v1203
        %1259 = vmatprep.subr.mxu0 0.0
        %1260 = vmatpush1.msra.mxu0 %v1204
        %1261 = vmatprep.subr.mxu0 0.0
        %1262 = vmatpush1.msra.mxu0 %v1205
        %1263 = vmatprep.subr.mxu0 0.0
        %1264 = vmatpush1.msra.mxu0 %v1206
        %1265 = vmatprep.subr.mxu0 0.0
        %1266 = vmatpush1.msra.mxu0 %v1207
        %1267 = vmatprep.subr.mxu0 0.0
        %1268 = vmatpush1.msra.mxu0 %v1208
        %1269 = vmatprep.subr.mxu0 0.0
        %1270 = vmatpush1.msra.mxu0 %v1209
        %1271 = vmatprep.subr.mxu0 0.0
        %1272 = vmatpush1.msra.mxu0 %v1210
        %1273 = vmatprep.subr.mxu0 0.0
        %1274 = vmatpush1.msra.mxu0 %v1211
        %1275 = vmatprep.subr.mxu0 0.0
        %1276 = vmatpush1.msra.mxu0 %v1212
        %1277 = vmatprep.subr.mxu0 0.0
        %1278 = vmatpush1.msra.mxu0 %v1213
        %1279 = vmatprep.subr.mxu0 0.0
        %1280 = vmatpush1.msra.mxu0 %v1214
        %1281 = vmatprep.subr.mxu0 0.0
        %1282 = vmatpush1.msra.mxu0 %v1215
        %1283 = vmatprep.subr.mxu0 0.0
        %1284 = vmatpush1.msra.mxu0 %v1216
        %1285 = vmatprep.subr.mxu0 0.0
        %1286 = vmatpush1.msra.mxu0 %v1217
        %1287 = vmatprep.subr.mxu0 0.0
        %1288 = vmatpush1.msra.mxu0 %v1218
        %1289 = vmatprep.subr.mxu0 0.0
        %1290 = vmatpush1.msra.mxu0 %v1219
        %1291 = vmatprep.mubr.f32.mxu0 %v1187
        %1292 = vmatmul.mubr.f32.gmra.mrb[0].mxu0 %v1184
        %v1293 = vpop.f32.mrb[0].mxu0
        %v1294 = vadd.f32 %v1225, %v1293
        %v1295 = vpop.f32.mrb[0].mxu0
        %1296 = vdwg.mxu0
        %v1298 = vrot.slane %v1294, 1
        %v1300 = vmax.f32 %v1294, %v1298
        %v1301 = vrot.slane %v1294, 2
        %v1303 = vmax.f32 %v1300, %v1301
        %v1304 = vrot.slane %v1294, 3
        %v1306 = vmax.f32 %v1303, %v1304
        %v1308 = vrot.slane %v1306, 4
        %1309 = vrot.lane.b32.xlu0 %v1308, 32
        %v1310 = vpop.permute.xlu0 %1309
        %v1312 = vsel %vm797, %v1306, %v1310
        %v1313 = vld [vmem:[%s508] sm:$0xff]
        %v1314 = vlaneseq
        %v1315 = vand.u32 %v1314, 127
        %vm1316 = vcmp.lt.s32.totalorder %v1315, 50
        %1317 = vset.pattern.permute.xlu0 0
        %1318 = vperm.xlu0 %1317, %v1313
        %v1319 = vpop.permute.xlu0 %1318
        %vm1320 = vcmp.eq.s32.totalorder %v1315, %v1319
        %v1321 = vsel %vm1320, 1, 0
        %v1322 = vcvt.s32.f32 %v1321
        %v1323 = vsub.s32 %v1315, 50
        %1324 = vset.pattern.permute.xlu0 1
        %1325 = vperm.xlu0 %1324, %v1313
        %v1326 = vpop.permute.xlu0 %1325
        %vm1327 = vcmp.eq.s32.totalorder %v1323, %v1326
        %v1328 = vsel %vm1327, 1, 0
        %v1329 = vcvt.s32.f32 %v1328
        %v1330 = vsel %vm1316, %v1322, %v1329
        %v1331 = vld [vmem:[%s6] sm:$0xff]
        %v1332 = vld [vmem:[%s6 + $0x8] sm:$0xff]
        %v1333 = vld [vmem:[%s6 + $0x10] sm:$0xff]
        %v1334 = vld [vmem:[%s6 + $0x18] sm:$0xff]
        %v1335 = vld [vmem:[%s6 + $0x20] sm:$0xff]
        %v1336 = vld [vmem:[%s6 + $0x28] sm:$0xff]
        %v1337 = vld [vmem:[%s6 + $0x30] sm:$0xff]
        %v1338 = vld [vmem:[%s6 + $0x38] sm:$0xff]
        %v1339 = vld [vmem:[%s6 + $0x40] sm:$0xff]
        %v1340 = vld [vmem:[%s6 + $0x48] sm:$0xff]
        %v1341 = vld [vmem:[%s6 + $0x50] sm:$0xff]
        %v1342 = vld [vmem:[%s6 + $0x58] sm:$0xff]
        %v1343 = vld [vmem:[%s6 + $0x60] sm:$0xf]
        %v1344 = vld [vmem:[%s7] sm:$0x1]
        %v1346 = vlaneseq
        %v1347 = vshrl.u32 %v1346, 7
        %v1348 = vsub.s32 0, %v1347
        %v1349 = vrot.slane %v1344, %v1348
        %vm1351 = vcmask 818176
        %v1353 = vsel %vm1351, %v1330, 0
        %v1356 = vsel %vm646, %v1343, 0
        %1358 = vmatprep.subr.mxu0 0.0
        %1359 = vmatpush1.msra.mxu0 %v1331
        %1360 = vmatprep.subr.mxu0 0.0
        %1361 = vmatpush1.msra.mxu0 %v1332
        %1362 = vmatprep.subr.mxu0 0.0
        %1363 = vmatpush1.msra.mxu0 %v1333
        %1364 = vmatprep.subr.mxu0 0.0
        %1365 = vmatpush1.msra.mxu0 %v1334
        %1366 = vmatprep.subr.mxu0 0.0
        %1367 = vmatpush1.msra.mxu0 %v1335
        %1368 = vmatprep.subr.mxu0 0.0
        %1369 = vmatpush1.msra.mxu0 %v1336
        %1370 = vmatprep.subr.mxu0 0.0
        %1371 = vmatpush1.msra.mxu0 %v1337
        %1372 = vmatprep.subr.mxu0 0.0
        %1373 = vmatpush1.msra.mxu0 %v1338
        %1374 = vmatprep.subr.mxu0 0.0
        %1375 = vmatpush1.msra.mxu0 %v1339
        %1376 = vmatprep.subr.mxu0 0.0
        %1377 = vmatpush1.msra.mxu0 %v1340
        %1378 = vmatprep.subr.mxu0 0.0
        %1379 = vmatpush1.msra.mxu0 %v1341
        %1380 = vmatprep.subr.mxu0 0.0
        %1381 = vmatpush1.msra.mxu0 %v1342
        %1382 = vmatprep.subr.mxu0 0.0
        %1383 = vmatpush1.msra.mxu0 %v1356
        %1384 = vmatprep.subr.mxu0 0.0
        %1385 = vmatpush1.msra.mxu0 0.0
        %1386 = vmatprep.subr.mxu0 0.0
        %1387 = vmatpush1.msra.mxu0 0.0
        %1388 = vmatprep.subr.mxu0 0.0
        %1389 = vmatpush1.msra.mxu0 0.0
        %1390 = vmatprep.subr.mxu0 0.0
        %1391 = vmatpush1.msra.mxu0 0.0
        %1392 = vmatprep.subr.mxu0 0.0
        %1393 = vmatpush1.msra.mxu0 0.0
        %1394 = vmatprep.subr.mxu0 0.0
        %1395 = vmatpush1.msra.mxu0 0.0
        %1396 = vmatprep.subr.mxu0 0.0
        %1397 = vmatpush1.msra.mxu0 0.0
        %1398 = vmatprep.subr.mxu0 0.0
        %1399 = vmatpush1.msra.mxu0 0.0
        %1400 = vmatprep.subr.mxu0 0.0
        %1401 = vmatpush1.msra.mxu0 0.0
        %1402 = vmatprep.subr.mxu0 0.0
        %1403 = vmatpush1.msra.mxu0 0.0
        %1404 = vmatprep.subr.mxu0 0.0
        %1405 = vmatpush1.msra.mxu0 0.0
        %1406 = vmatprep.subr.mxu0 0.0
        %1407 = vmatpush1.msra.mxu0 0.0
        %1408 = vmatprep.subr.mxu0 0.0
        %1409 = vmatpush1.msra.mxu0 0.0
        %1410 = vmatprep.subr.mxu0 0.0
        %1411 = vmatpush1.msra.mxu0 0.0
        %1412 = vmatprep.subr.mxu0 0.0
        %1413 = vmatpush1.msra.mxu0 0.0
        %1414 = vmatprep.subr.mxu0 0.0
        %1415 = vmatpush1.msra.mxu0 0.0
        %1416 = vmatprep.subr.mxu0 0.0
        %1417 = vmatpush1.msra.mxu0 0.0
        %1418 = vmatprep.subr.mxu0 0.0
        %1419 = vmatpush1.msra.mxu0 0.0
        %1420 = vmatprep.subr.mxu0 0.0
        %1421 = vmatpush1.msra.mxu0 0.0
        %1422 = vmatprep.mubr.f32.mxu0 0.0
        %1423 = vmatmul.mubr.f32.gmra.mrb[0].mxu0 %v1353
        %v1424 = vpop.f32.mrb[0].mxu0
        %v1425 = vadd.f32 %v1349, %v1424
        %v1426 = vpop.f32.mrb[0].mxu0
        %1427 = vdwg.mxu0
        %v1428 = vmax.f32 %v1425, 0.0
        %v1430 = vrot.slane %v1428, 1
        %v1432 = vmax.f32 %v1428, %v1430
        %v1434 = vrot.slane %v1432, 1
        %v1436 = vrot.slane %v1432, 2
        %v1438 = vrot.slane %v1432, 3
        %v1440 = vsel %vm755, %v1432, %v1434
        %v1441 = vsel %vm713, %v1440, %v1436
        %v1442 = vsel %vm671, %v1441, %v1438
        %v1443 = vld [vmem:[%s8] sm:$0xff]
        %v1444 = vld [vmem:[%s8 + $0x8] sm:$0xff]
        %v1445 = vld [vmem:[%s10] sm:$0x1]
        %v1447 = vlaneseq
        %v1448 = vshrl.u32 %v1447, 7
        %v1449 = vsub.s32 0, %v1448
        %v1450 = vrot.slane %v1445, %v1449
        %vm1452 = vcmask 130048
        %v1454 = vsel %vm1452, %v1442, 0
        %1456 = vmatprep.subr.mxu0 0.0
        %1457 = vmatpush1.msra.mxu0 %v1443
        %1458 = vmatprep.subr.mxu0 0.0
        %1459 = vmatpush1.msra.mxu0 %v1444
        %1460 = vmatprep.subr.mxu0 0.0
        %1461 = vmatpush1.msra.mxu0 0.0
        %1462 = vmatprep.subr.mxu0 0.0
        %1463 = vmatpush1.msra.mxu0 0.0
        %1464 = vmatprep.subr.mxu0 0.0
        %1465 = vmatpush1.msra.mxu0 0.0
        %1466 = vmatprep.subr.mxu0 0.0
        %1467 = vmatpush1.msra.mxu0 0.0
        %1468 = vmatprep.subr.mxu0 0.0
        %1469 = vmatpush1.msra.mxu0 0.0
        %1470 = vmatprep.subr.mxu0 0.0
        %1471 = vmatpush1.msra.mxu0 0.0
        %1472 = vmatprep.subr.mxu0 0.0
        %1473 = vmatpush1.msra.mxu0 0.0
        %1474 = vmatprep.subr.mxu0 0.0
        %1475 = vmatpush1.msra.mxu0 0.0
        %1476 = vmatprep.subr.mxu0 0.0
        %1477 = vmatpush1.msra.mxu0 0.0
        %1478 = vmatprep.subr.mxu0 0.0
        %1479 = vmatpush1.msra.mxu0 0.0
        %1480 = vmatprep.subr.mxu0 0.0
        %1481 = vmatpush1.msra.mxu0 0.0
        %1482 = vmatprep.subr.mxu0 0.0
        %1483 = vmatpush1.msra.mxu0 0.0
        %1484 = vmatprep.subr.mxu0 0.0
        %1485 = vmatpush1.msra.mxu0 0.0
        %1486 = vmatprep.subr.mxu0 0.0
        %1487 = vmatpush1.msra.mxu0 0.0
        %1488 = vmatprep.subr.mxu0 0.0
        %1489 = vmatpush1.msra.mxu0 0.0
        %1490 = vmatprep.subr.mxu0 0.0
        %1491 = vmatpush1.msra.mxu0 0.0
        %1492 = vmatprep.subr.mxu0 0.0
        %1493 = vmatpush1.msra.mxu0 0.0
        %1494 = vmatprep.subr.mxu0 0.0
        %1495 = vmatpush1.msra.mxu0 0.0
        %1496 = vmatprep.subr.mxu0 0.0
        %1497 = vmatpush1.msra.mxu0 0.0
        %1498 = vmatprep.subr.mxu0 0.0
        %1499 = vmatpush1.msra.mxu0 0.0
        %1500 = vmatprep.subr.mxu0 0.0
        %1501 = vmatpush1.msra.mxu0 0.0
        %1502 = vmatprep.subr.mxu0 0.0
        %1503 = vmatpush1.msra.mxu0 0.0
        %1504 = vmatprep.subr.mxu0 0.0
        %1505 = vmatpush1.msra.mxu0 0.0
        %1506 = vmatprep.subr.mxu0 0.0
        %1507 = vmatpush1.msra.mxu0 0.0
        %1508 = vmatprep.subr.mxu0 0.0
        %1509 = vmatpush1.msra.mxu0 0.0
        %1510 = vmatprep.subr.mxu0 0.0
        %1511 = vmatpush1.msra.mxu0 0.0
        %1512 = vmatprep.subr.mxu0 0.0
        %1513 = vmatpush1.msra.mxu0 0.0
        %1514 = vmatprep.subr.mxu0 0.0
        %1515 = vmatpush1.msra.mxu0 0.0
        %1516 = vmatprep.subr.mxu0 0.0
        %1517 = vmatpush1.msra.mxu0 0.0
        %1518 = vmatprep.subr.mxu0 0.0
        %1519 = vmatpush1.msra.mxu0 0.0
        %1520 = vmatprep.mubr.f32.mxu0 0.0
        %1521 = vmatmul.mubr.f32.gmra.mrb[0].mxu0 %v1454
        %v1522 = vpop.f32.mrb[0].mxu0
        %v1523 = vadd.f32 %v1450, %v1522
        %v1524 = vpop.f32.mrb[0].mxu0
        %1525 = vdwg.mxu0
        %v1526 = vld [vmem:[%s9] sm:$0xff]
        %vm1527 = vcmp.ge.s32.totalorder %v1315, 16
        %vm1528 = vcmp.lt.s32.totalorder %v1315, 24
        %vm1529 = vmand %vm1527, %vm1528
        %vm1530 = vcmask 64512
        %v1532 = vsel %vm1530, 0.0, 0
        %1534 = vmatprep.subr.mxu0 0.0
        %1535 = vmatpush1.msra.mxu0 %v1526
        %1536 = vmatprep.subr.mxu0 0.0
        %1537 = vmatpush1.msra.mxu0 0.0
        %1538 = vmatprep.subr.mxu0 0.0
        %1539 = vmatpush1.msra.mxu0 0.0
        %1540 = vmatprep.subr.mxu0 0.0
        %1541 = vmatpush1.msra.mxu0 0.0
        %1542 = vmatprep.subr.mxu0 0.0
        %1543 = vmatpush1.msra.mxu0 0.0
        %1544 = vmatprep.subr.mxu0 0.0
        %1545 = vmatpush1.msra.mxu0 0.0
        %1546 = vmatprep.subr.mxu0 0.0
        %1547 = vmatpush1.msra.mxu0 0.0
        %1548 = vmatprep.subr.mxu0 0.0
        %1549 = vmatpush1.msra.mxu0 0.0
        %1550 = vmatprep.subr.mxu0 0.0
        %1551 = vmatpush1.msra.mxu0 0.0
        %1552 = vmatprep.subr.mxu0 0.0
        %1553 = vmatpush1.msra.mxu0 0.0
        %1554 = vmatprep.subr.mxu0 0.0
        %1555 = vmatpush1.msra.mxu0 0.0
        %1556 = vmatprep.subr.mxu0 0.0
        %1557 = vmatpush1.msra.mxu0 0.0
        %1558 = vmatprep.subr.mxu0 0.0
        %1559 = vmatpush1.msra.mxu0 0.0
        %1560 = vmatprep.subr.mxu0 0.0
        %1561 = vmatpush1.msra.mxu0 0.0
        %1562 = vmatprep.subr.mxu0 0.0
        %1563 = vmatpush1.msra.mxu0 0.0
        %1564 = vmatprep.subr.mxu0 0.0
        %1565 = vmatpush1.msra.mxu0 0.0
        %1566 = vmatprep.subr.mxu0 0.0
        %1567 = vmatpush1.msra.mxu0 0.0
        %1568 = vmatprep.subr.mxu0 0.0
        %1569 = vmatpush1.msra.mxu0 0.0
        %1570 = vmatprep.subr.mxu0 0.0
        %1571 = vmatpush1.msra.mxu0 0.0
        %1572 = vmatprep.subr.mxu0 0.0
        %1573 = vmatpush1.msra.mxu0 0.0
        %1574 = vmatprep.subr.mxu0 0.0
        %1575 = vmatpush1.msra.mxu0 0.0
        %1576 = vmatprep.subr.mxu0 0.0
        %1577 = vmatpush1.msra.mxu0 0.0
        %1578 = vmatprep.subr.mxu0 0.0
        %1579 = vmatpush1.msra.mxu0 0.0
        %1580 = vmatprep.subr.mxu0 0.0
        %1581 = vmatpush1.msra.mxu0 0.0
        %1582 = vmatprep.subr.mxu0 0.0
        %1583 = vmatpush1.msra.mxu0 0.0
        %1584 = vmatprep.subr.mxu0 0.0
        %1585 = vmatpush1.msra.mxu0 0.0
        %1586 = vmatprep.subr.mxu0 0.0
        %1587 = vmatpush1.msra.mxu0 0.0
        %1588 = vmatprep.subr.mxu0 0.0
        %1589 = vmatpush1.msra.mxu0 0.0
        %1590 = vmatprep.subr.mxu0 0.0
        %1591 = vmatpush1.msra.mxu0 0.0
        %1592 = vmatprep.subr.mxu0 0.0
        %1593 = vmatpush1.msra.mxu0 0.0
        %1594 = vmatprep.subr.mxu0 0.0
        %1595 = vmatpush1.msra.mxu0 0.0
        %1596 = vmatprep.subr.mxu0 0.0
        %1597 = vmatpush1.msra.mxu0 0.0
        %1598 = vmatprep.mubr.f32.mxu0 0.0
        %1599 = vmatmul.mubr.f32.gmra.mrb[0].mxu0 %v1532
        %v1600 = vpop.f32.mrb[0].mxu0
        %v1601 = vadd.f32 0.0, %v1600
        %v1602 = vpop.f32.mrb[0].mxu0
        %1603 = vdwg.mxu0
        %v1604 = vadd.f32 %v1523, %v1601
        %v1605 = vxor.u32 %v1604, 2147483648
        %v1606 = vmul.f32 %v1605, 1.442695
        %v1607 = vpow.pop %v1606
        %v1608 = vadd.f32 %v1607, 1.0
        %v1609 = vrcp.pop %v1608
        %v1610 = vmul.f32 1.0, %v1609
        %v1611 = vmul.f32 %v1610, 2.0
        %v1612 = vsub.f32 %v1611, 1.0
        %v1613 = vsel %vm1529, %v1612, %v1610
        %v1614 = vmul.f32 %v1613, 0.0
        %1616 = vrot.lane.b32.xlu0 %v1613, 112
        %v1617 = vpop.permute.xlu0 %1616
        %v1619 = vmul.f32 %v1613, %v1617
        %1621 = vrot.lane.b32.xlu0 %v1619, 8
        %v1622 = vpop.permute.xlu0 %1621
        %v1624 = vadd.f32 %v1614, %v1622
        %v1625 = vtanh.pop %v1624
        %1627 = vrot.lane.b32.xlu0 %v1625, 16
        %v1628 = vpop.permute.xlu0 %1627
        %v1630 = vmul.f32 %v1613, %v1628
        %1632 = vrot.lane.b32.xlu0 %v1630, 104
        %v1633 = vpop.permute.xlu0 %1632
        %v1634 = vsel %vm1530, %v1633, 0
        %1636 = vmatprep.subr.mxu0 0.0
        %1637 = vmatpush1.msra.mxu0 %v1526
        %1638 = vmatprep.subr.mxu0 0.0
        %1639 = vmatpush1.msra.mxu0 0.0
        %1640 = vmatprep.subr.mxu0 0.0
        %1641 = vmatpush1.msra.mxu0 0.0
        %1642 = vmatprep.subr.mxu0 0.0
        %1643 = vmatpush1.msra.mxu0 0.0
        %1644 = vmatprep.subr.mxu0 0.0
        %1645 = vmatpush1.msra.mxu0 0.0
        %1646 = vmatprep.subr.mxu0 0.0
        %1647 = vmatpush1.msra.mxu0 0.0
        %1648 = vmatprep.subr.mxu0 0.0
        %1649 = vmatpush1.msra.mxu0 0.0
        %1650 = vmatprep.subr.mxu0 0.0
        %1651 = vmatpush1.msra.mxu0 0.0
        %1652 = vmatprep.subr.mxu0 0.0
        %1653 = vmatpush1.msra.mxu0 0.0
        %1654 = vmatprep.subr.mxu0 0.0
        %1655 = vmatpush1.msra.mxu0 0.0
        %1656 = vmatprep.subr.mxu0 0.0
        %1657 = vmatpush1.msra.mxu0 0.0
        %1658 = vmatprep.subr.mxu0 0.0
        %1659 = vmatpush1.msra.mxu0 0.0
        %1660 = vmatprep.subr.mxu0 0.0
        %1661 = vmatpush1.msra.mxu0 0.0
        %1662 = vmatprep.subr.mxu0 0.0
        %1663 = vmatpush1.msra.mxu0 0.0
        %1664 = vmatprep.subr.mxu0 0.0
        %1665 = vmatpush1.msra.mxu0 0.0
        %1666 = vmatprep.subr.mxu0 0.0
        %1667 = vmatpush1.msra.mxu0 0.0
        %1668 = vmatprep.subr.mxu0 0.0
        %1669 = vmatpush1.msra.mxu0 0.0
        %1670 = vmatprep.subr.mxu0 0.0
        %1671 = vmatpush1.msra.mxu0 0.0
        %1672 = vmatprep.subr.mxu0 0.0
        %1673 = vmatpush1.msra.mxu0 0.0
        %1674 = vmatprep.subr.mxu0 0.0
        %1675 = vmatpush1.msra.mxu0 0.0
        %1676 = vmatprep.subr.mxu0 0.0
        %1677 = vmatpush1.msra.mxu0 0.0
        %1678 = vmatprep.subr.mxu0 0.0
        %1679 = vmatpush1.msra.mxu0 0.0
        %1680 = vmatprep.subr.mxu0 0.0
        %1681 = vmatpush1.msra.mxu0 0.0
        %1682 = vmatprep.subr.mxu0 0.0
        %1683 = vmatpush1.msra.mxu0 0.0
        %1684 = vmatprep.subr.mxu0 0.0
        %1685 = vmatpush1.msra.mxu0 0.0
        %1686 = vmatprep.subr.mxu0 0.0
        %1687 = vmatpush1.msra.mxu0 0.0
        %1688 = vmatprep.subr.mxu0 0.0
        %1689 = vmatpush1.msra.mxu0 0.0
        %1690 = vmatprep.subr.mxu0 0.0
        %1691 = vmatpush1.msra.mxu0 0.0
        %1692 = vmatprep.subr.mxu0 0.0
        %1693 = vmatpush1.msra.mxu0 0.0
        %1694 = vmatprep.subr.mxu0 0.0
        %1695 = vmatpush1.msra.mxu0 0.0
        %1696 = vmatprep.subr.mxu0 0.0
        %1697 = vmatpush1.msra.mxu0 0.0
        %1698 = vmatprep.subr.mxu0 0.0
        %1699 = vmatpush1.msra.mxu0 0.0
        %1700 = vmatprep.mubr.f32.mxu0 0.0
        %1701 = vmatmul.mubr.f32.gmra.mrb[0].mxu0 %v1634
        %v1702 = vpop.f32.mrb[0].mxu0
        %v1703 = vadd.f32 0.0, %v1702
        %v1704 = vpop.f32.mrb[0].mxu0
        %1705 = vdwg.mxu0
        %v1707 = vrot.slane %v1703, 7
        %v1709 = vadd.f32 %v1523, %v1707
        %v1710 = vxor.u32 %v1709, 2147483648
        %v1711 = vmul.f32 %v1710, 1.442695
        %v1712 = vpow.pop %v1711
        %v1713 = vadd.f32 %v1712, 1.0
        %v1714 = vrcp.pop %v1713
        %v1715 = vmul.f32 1.0, %v1714
        %v1716 = vmul.f32 %v1715, 2.0
        %v1717 = vsub.f32 %v1716, 1.0
        %v1718 = vsel %vm1529, %v1717, %v1715
        %v1720 = vrot.slane %v1624, 7
        %v1722 = vmul.f32 %v1718, %v1720
        %1724 = vrot.lane.b32.xlu0 %v1718, 112
        %v1725 = vpop.permute.xlu0 %1724
        %v1727 = vmul.f32 %v1718, %v1725
        %1729 = vrot.lane.b32.xlu0 %v1727, 8
        %v1730 = vpop.permute.xlu0 %1729
        %v1732 = vadd.f32 %v1722, %v1730
        %v1733 = vtanh.pop %v1732
        %1735 = vrot.lane.b32.xlu0 %v1733, 16
        %v1736 = vpop.permute.xlu0 %1735
        %v1738 = vmul.f32 %v1718, %v1736
        %v1740 = vrot.slane %v1738, 1
        %1741 = vrot.lane.b32.xlu0 %v1740, 104
        %v1742 = vpop.permute.xlu0 %1741
        %v1743 = vsel %vm1530, %v1742, 0
        %1745 = vmatprep.subr.mxu0 0.0
        %1746 = vmatpush1.msra.mxu0 %v1526
        %1747 = vmatprep.subr.mxu0 0.0
        %1748 = vmatpush1.msra.mxu0 0.0
        %1749 = vmatprep.subr.mxu0 0.0
        %1750 = vmatpush1.msra.mxu0 0.0
        %1751 = vmatprep.subr.mxu0 0.0
        %1752 = vmatpush1.msra.mxu0 0.0
        %1753 = vmatprep.subr.mxu0 0.0
        %1754 = vmatpush1.msra.mxu0 0.0
        %1755 = vmatprep.subr.mxu0 0.0
        %1756 = vmatpush1.msra.mxu0 0.0
        %1757 = vmatprep.subr.mxu0 0.0
        %1758 = vmatpush1.msra.mxu0 0.0
        %1759 = vmatprep.subr.mxu0 0.0
        %1760 = vmatpush1.msra.mxu0 0.0
        %1761 = vmatprep.subr.mxu0 0.0
        %1762 = vmatpush1.msra.mxu0 0.0
        %1763 = vmatprep.subr.mxu0 0.0
        %1764 = vmatpush1.msra.mxu0 0.0
        %1765 = vmatprep.subr.mxu0 0.0
        %1766 = vmatpush1.msra.mxu0 0.0
        %1767 = vmatprep.subr.mxu0 0.0
        %1768 = vmatpush1.msra.mxu0 0.0
        %1769 = vmatprep.subr.mxu0 0.0
        %1770 = vmatpush1.msra.mxu0 0.0
        %1771 = vmatprep.subr.mxu0 0.0
        %1772 = vmatpush1.msra.mxu0 0.0
        %1773 = vmatprep.subr.mxu0 0.0
        %1774 = vmatpush1.msra.mxu0 0.0
        %1775 = vmatprep.subr.mxu0 0.0
        %1776 = vmatpush1.msra.mxu0 0.0
        %1777 = vmatprep.subr.mxu0 0.0
        %1778 = vmatpush1.msra.mxu0 0.0
        %1779 = vmatprep.subr.mxu0 0.0
        %1780 = vmatpush1.msra.mxu0 0.0
        %1781 = vmatprep.subr.mxu0 0.0
        %1782 = vmatpush1.msra.mxu0 0.0
        %1783 = vmatprep.subr.mxu0 0.0
        %1784 = vmatpush1.msra.mxu0 0.0
        %1785 = vmatprep.subr.mxu0 0.0
        %1786 = vmatpush1.msra.mxu0 0.0
        %1787 = vmatprep.subr.mxu0 0.0
        %1788 = vmatpush1.msra.mxu0 0.0
        %1789 = vmatprep.subr.mxu0 0.0
        %1790 = vmatpush1.msra.mxu0 0.0
        %1791 = vmatprep.subr.mxu0 0.0
        %1792 = vmatpush1.msra.mxu0 0.0
        %1793 = vmatprep.subr.mxu0 0.0
        %1794 = vmatpush1.msra.mxu0 0.0
        %1795 = vmatprep.subr.mxu0 0.0
        %1796 = vmatpush1.msra.mxu0 0.0
        %1797 = vmatprep.subr.mxu0 0.0
        %1798 = vmatpush1.msra.mxu0 0.0
        %1799 = vmatprep.subr.mxu0 0.0
        %1800 = vmatpush1.msra.mxu0 0.0
        %1801 = vmatprep.subr.mxu0 0.0
        %1802 = vmatpush1.msra.mxu0 0.0
        %1803 = vmatprep.subr.mxu0 0.0
        %1804 = vmatpush1.msra.mxu0 0.0
        %1805 = vmatprep.subr.mxu0 0.0
        %1806 = vmatpush1.msra.mxu0 0.0
        %1807 = vmatprep.subr.mxu0 0.0
        %1808 = vmatpush1.msra.mxu0 0.0
        %1809 = vmatprep.mubr.f32.mxu0 0.0
        %1810 = vmatmul.mubr.f32.gmra.mrb[0].mxu0 %v1743
        %v1811 = vpop.f32.mrb[0].mxu0
        %v1812 = vadd.f32 0.0, %v1811
        %v1813 = vpop.f32.mrb[0].mxu0
        %1814 = vdwg.mxu0
        %v1816 = vrot.slane %v1812, 6
        %v1818 = vadd.f32 %v1523, %v1816
        %v1819 = vxor.u32 %v1818, 2147483648
        %v1820 = vmul.f32 %v1819, 1.442695
        %v1821 = vpow.pop %v1820
        %v1822 = vadd.f32 %v1821, 1.0
        %v1823 = vrcp.pop %v1822
        %v1824 = vmul.f32 1.0, %v1823
        %v1825 = vmul.f32 %v1824, 2.0
        %v1826 = vsub.f32 %v1825, 1.0
        %v1827 = vsel %vm1529, %v1826, %v1824
        %v1829 = vrot.slane %v1732, 7
        %v1831 = vmul.f32 %v1827, %v1829
        %1833 = vrot.lane.b32.xlu0 %v1827, 112
        %v1834 = vpop.permute.xlu0 %1833
        %v1836 = vmul.f32 %v1827, %v1834
        %1838 = vrot.lane.b32.xlu0 %v1836, 8
        %v1839 = vpop.permute.xlu0 %1838
        %v1841 = vadd.f32 %v1831, %v1839
        %v1842 = vtanh.pop %v1841
        %1844 = vrot.lane.b32.xlu0 %v1842, 16
        %v1845 = vpop.permute.xlu0 %1844
        %v1847 = vmul.f32 %v1827, %v1845
        %v1849 = vrot.slane %v1847, 2
        %1850 = vrot.lane.b32.xlu0 %v1849, 104
        %v1851 = vpop.permute.xlu0 %1850
        %v1852 = vsel %vm1530, %v1851, 0
        %1854 = vmatprep.subr.mxu0 0.0
        %1855 = vmatpush1.msra.mxu0 %v1526
        %1856 = vmatprep.subr.mxu0 0.0
        %1857 = vmatpush1.msra.mxu0 0.0
        %1858 = vmatprep.subr.mxu0 0.0
        %1859 = vmatpush1.msra.mxu0 0.0
        %1860 = vmatprep.subr.mxu0 0.0
        %1861 = vmatpush1.msra.mxu0 0.0
        %1862 = vmatprep.subr.mxu0 0.0
        %1863 = vmatpush1.msra.mxu0 0.0
        %1864 = vmatprep.subr.mxu0 0.0
        %1865 = vmatpush1.msra.mxu0 0.0
        %1866 = vmatprep.subr.mxu0 0.0
        %1867 = vmatpush1.msra.mxu0 0.0
        %1868 = vmatprep.subr.mxu0 0.0
        %1869 = vmatpush1.msra.mxu0 0.0
        %1870 = vmatprep.subr.mxu0 0.0
        %1871 = vmatpush1.msra.mxu0 0.0
        %1872 = vmatprep.subr.mxu0 0.0
        %1873 = vmatpush1.msra.mxu0 0.0
        %1874 = vmatprep.subr.mxu0 0.0
        %1875 = vmatpush1.msra.mxu0 0.0
        %1876 = vmatprep.subr.mxu0 0.0
        %1877 = vmatpush1.msra.mxu0 0.0
        %1878 = vmatprep.subr.mxu0 0.0
        %1879 = vmatpush1.msra.mxu0 0.0
        %1880 = vmatprep.subr.mxu0 0.0
        %1881 = vmatpush1.msra.mxu0 0.0
        %1882 = vmatprep.subr.mxu0 0.0
        %1883 = vmatpush1.msra.mxu0 0.0
        %1884 = vmatprep.subr.mxu0 0.0
        %1885 = vmatpush1.msra.mxu0 0.0
        %1886 = vmatprep.subr.mxu0 0.0
        %1887 = vmatpush1.msra.mxu0 0.0
        %1888 = vmatprep.subr.mxu0 0.0
        %1889 = vmatpush1.msra.mxu0 0.0
        %1890 = vmatprep.subr.mxu0 0.0
        %1891 = vmatpush1.msra.mxu0 0.0
        %1892 = vmatprep.subr.mxu0 0.0
        %1893 = vmatpush1.msra.mxu0 0.0
        %1894 = vmatprep.subr.mxu0 0.0
        %1895 = vmatpush1.msra.mxu0 0.0
        %1896 = vmatprep.subr.mxu0 0.0
        %1897 = vmatpush1.msra.mxu0 0.0
        %1898 = vmatprep.subr.mxu0 0.0
        %1899 = vmatpush1.msra.mxu0 0.0
        %1900 = vmatprep.subr.mxu0 0.0
        %1901 = vmatpush1.msra.mxu0 0.0
        %1902 = vmatprep.subr.mxu0 0.0
        %1903 = vmatpush1.msra.mxu0 0.0
        %1904 = vmatprep.subr.mxu0 0.0
        %1905 = vmatpush1.msra.mxu0 0.0
        %1906 = vmatprep.subr.mxu0 0.0
        %1907 = vmatpush1.msra.mxu0 0.0
        %1908 = vmatprep.subr.mxu0 0.0
        %1909 = vmatpush1.msra.mxu0 0.0
        %1910 = vmatprep.subr.mxu0 0.0
        %1911 = vmatpush1.msra.mxu0 0.0
        %1912 = vmatprep.subr.mxu0 0.0
        %1913 = vmatpush1.msra.mxu0 0.0
        %1914 = vmatprep.subr.mxu0 0.0
        %1915 = vmatpush1.msra.mxu0 0.0
        %1916 = vmatprep.subr.mxu0 0.0
        %1917 = vmatpush1.msra.mxu0 0.0
        %1918 = vmatprep.mubr.f32.mxu0 0.0
        %1919 = vmatmul.mubr.f32.gmra.mrb[0].mxu0 %v1852
        %v1920 = vpop.f32.mrb[0].mxu0
        %v1921 = vadd.f32 0.0, %v1920
        %v1922 = vpop.f32.mrb[0].mxu0
        %1923 = vdwg.mxu0
        %v1925 = vrot.slane %v1921, 5
        %v1927 = vadd.f32 %v1523, %v1925
        %v1928 = vxor.u32 %v1927, 2147483648
        %v1929 = vmul.f32 %v1928, 1.442695
        %v1930 = vpow.pop %v1929
        %v1931 = vadd.f32 %v1930, 1.0
        %v1932 = vrcp.pop %v1931
        %v1933 = vmul.f32 1.0, %v1932
        %v1934 = vmul.f32 %v1933, 2.0
        %v1935 = vsub.f32 %v1934, 1.0
        %v1936 = vsel %vm1529, %v1935, %v1933
        %v1938 = vrot.slane %v1841, 7
        %v1940 = vmul.f32 %v1936, %v1938
        %1942 = vrot.lane.b32.xlu0 %v1936, 112
        %v1943 = vpop.permute.xlu0 %1942
        %v1945 = vmul.f32 %v1936, %v1943
        %1947 = vrot.lane.b32.xlu0 %v1945, 8
        %v1948 = vpop.permute.xlu0 %1947
        %v1950 = vadd.f32 %v1940, %v1948
        %v1951 = vtanh.pop %v1950
        %1953 = vrot.lane.b32.xlu0 %v1951, 16
        %v1954 = vpop.permute.xlu0 %1953
        %v1956 = vmul.f32 %v1936, %v1954
        %1958 = vrot.lane.b32.xlu0 %v1740, 112
        %v1959 = vpop.permute.xlu0 %1958
        %1961 = vrot.lane.b32.xlu0 %v1849, 120
        %v1962 = vpop.permute.xlu0 %1961
        %v1965 = vrot.slane %v1956, 3
        %v1967 = vsel %vm1530, %v1633, %v1959
        %v1968 = vsel %vm1452, %v1967, %v1962
        %vm1969 = vcmask 195584
        %v1970 = vsel %vm1969, %v1968, %v1965
        %1972 = vrot.lane.b32.xlu0 %v1970, 64
        %v1973 = vpop.permute.xlu0 %1972
        %v1975 = vsel %vm806, %v1312, %v1973
        %v1976 = vld [vmem:[%s11] sm:$0xff]
        %v1977 = vld [vmem:[%s11 + $0x8] sm:$0xff]
        %v1978 = vld [vmem:[%s11 + $0x10] sm:$0xff]
        %v1979 = vld [vmem:[%s11 + $0x18] sm:$0xff]
        %v1980 = vld [vmem:[%s11 + $0x20] sm:$0xff]
        %v1981 = vld [vmem:[%s11 + $0x28] sm:$0xff]
        %v1982 = vld [vmem:[%s11 + $0x30] sm:$0xff]
        %v1983 = vld [vmem:[%s11 + $0x38] sm:$0xff]
        %v1984 = vld [vmem:[%s11 + $0x40] sm:$0xff]
        %v1985 = vld [vmem:[%s11 + $0x48] sm:$0xff]
        %v1986 = vld [vmem:[%s11 + $0x50] sm:$0xff]
        %v1987 = vld [vmem:[%s11 + $0x58] sm:$0xff]
        %v1988 = vld [vmem:[%s12] sm:$0x1]
        %v1990 = vsel %vm815, %v1975, 0
        %1992 = vmatprep.subr.mxu0 0.0
        %1993 = vmatpush1.msra.mxu0 %v1976
        %1994 = vmatprep.subr.mxu0 0.0
        %1995 = vmatpush1.msra.mxu0 %v1977
        %1996 = vmatprep.subr.mxu0 0.0
        %1997 = vmatpush1.msra.mxu0 %v1978
        %1998 = vmatprep.subr.mxu0 0.0
        %1999 = vmatpush1.msra.mxu0 %v1979
        %2000 = vmatprep.subr.mxu0 0.0
        %2001 = vmatpush1.msra.mxu0 %v1980
        %2002 = vmatprep.subr.mxu0 0.0
        %2003 = vmatpush1.msra.mxu0 %v1981
        %2004 = vmatprep.subr.mxu0 0.0
        %2005 = vmatpush1.msra.mxu0 %v1982
        %2006 = vmatprep.subr.mxu0 0.0
        %2007 = vmatpush1.msra.mxu0 %v1983
        %2008 = vmatprep.subr.mxu0 0.0
        %2009 = vmatpush1.msra.mxu0 %v1984
        %2010 = vmatprep.subr.mxu0 0.0
        %2011 = vmatpush1.msra.mxu0 %v1985
        %2012 = vmatprep.subr.mxu0 0.0
        %2013 = vmatpush1.msra.mxu0 %v1986
        %2014 = vmatprep.subr.mxu0 0.0
        %2015 = vmatpush1.msra.mxu0 %v1987
        %2016 = vmatprep.subr.mxu0 0.0
        %2017 = vmatpush1.msra.mxu0 0.0
        %2018 = vmatprep.subr.mxu0 0.0
        %2019 = vmatpush1.msra.mxu0 0.0
        %2020 = vmatprep.subr.mxu0 0.0
        %2021 = vmatpush1.msra.mxu0 0.0
        %2022 = vmatprep.subr.mxu0 0.0
        %2023 = vmatpush1.msra.mxu0 0.0
        %2024 = vmatprep.subr.mxu0 0.0
        %2025 = vmatpush1.msra.mxu0 0.0
        %2026 = vmatprep.subr.mxu0 0.0
        %2027 = vmatpush1.msra.mxu0 0.0
        %2028 = vmatprep.subr.mxu0 0.0
        %2029 = vmatpush1.msra.mxu0 0.0
        %2030 = vmatprep.subr.mxu0 0.0
        %2031 = vmatpush1.msra.mxu0 0.0
        %2032 = vmatprep.subr.mxu0 0.0
        %2033 = vmatpush1.msra.mxu0 0.0
        %2034 = vmatprep.subr.mxu0 0.0
        %2035 = vmatpush1.msra.mxu0 0.0
        %2036 = vmatprep.subr.mxu0 0.0
        %2037 = vmatpush1.msra.mxu0 0.0
        %2038 = vmatprep.subr.mxu0 0.0
        %2039 = vmatpush1.msra.mxu0 0.0
        %2040 = vmatprep.subr.mxu0 0.0
        %2041 = vmatpush1.msra.mxu0 0.0
        %2042 = vmatprep.subr.mxu0 0.0
        %2043 = vmatpush1.msra.mxu0 0.0
        %2044 = vmatprep.subr.mxu0 0.0
        %2045 = vmatpush1.msra.mxu0 0.0
        %2046 = vmatprep.subr.mxu0 0.0
        %2047 = vmatpush1.msra.mxu0 0.0
        %2048 = vmatprep.subr.mxu0 0.0
        %2049 = vmatpush1.msra.mxu0 0.0
        %2050 = vmatprep.subr.mxu0 0.0
        %2051 = vmatpush1.msra.mxu0 0.0
        %2052 = vmatprep.subr.mxu0 0.0
        %2053 = vmatpush1.msra.mxu0 0.0
        %2054 = vmatprep.subr.mxu0 0.0
        %2055 = vmatpush1.msra.mxu0 0.0
        %2056 = vmatprep.mubr.f32.mxu0 0.0
        %2057 = vmatmul.mubr.f32.gmra.mrb[0].mxu0 %v1990
        %v2058 = vpop.f32.mrb[0].mxu0
        %v2059 = vadd.f32 %v1988, %v2058
        %v2060 = vpop.f32.mrb[0].mxu0
        %2061 = vdwg.mxu0
        %v2062 = vmax.f32 %v2059, -0.5
        %v2063 = vmin.f32 %v2062, 0.5
        %v2064 = vld [vmem:[%s13] sm:$0xff]
        %v2065 = vld [vmem:[%s13 + $0x8] sm:$0xff]
        %v2066 = vld [vmem:[%s13 + $0x10] sm:$0xff]
        %v2067 = vld [vmem:[%s13 + $0x18] sm:$0xff]
        %v2068 = vld [vmem:[%s13 + $0x20] sm:$0xff]
        %v2069 = vld [vmem:[%s13 + $0x28] sm:$0xff]
        %v2070 = vld [vmem:[%s13 + $0x30] sm:$0xff]
        %v2071 = vld [vmem:[%s13 + $0x38] sm:$0xff]
        %v2072 = vld [vmem:[%s13 + $0x40] sm:$0xff]
        %v2073 = vld [vmem:[%s13 + $0x48] sm:$0xff]
        %v2074 = vld [vmem:[%s13 + $0x50] sm:$0xff]
        %v2075 = vld [vmem:[%s13 + $0x58] sm:$0xff]
        %v2076 = vld [vmem:[%s13 + $0x60] sm:$0xf]
        %v2077 = vld [vmem:[%s14] sm:$0x1]
        %v2079 = vsel %vm1351, %v2063, 0
        %v2082 = vsel %vm646, %v2076, 0
        %2084 = vmatprep.subr.mxu0 0.0
        %2085 = vmatpush1.msra.mxu0 %v2064
        %2086 = vmatprep.subr.mxu0 0.0
        %2087 = vmatpush1.msra.mxu0 %v2065
        %2088 = vmatprep.subr.mxu0 0.0
        %2089 = vmatpush1.msra.mxu0 %v2066
        %2090 = vmatprep.subr.mxu0 0.0
        %2091 = vmatpush1.msra.mxu0 %v2067
        %2092 = vmatprep.subr.mxu0 0.0
        %2093 = vmatpush1.msra.mxu0 %v2068
        %2094 = vmatprep.subr.mxu0 0.0
        %2095 = vmatpush1.msra.mxu0 %v2069
        %2096 = vmatprep.subr.mxu0 0.0
        %2097 = vmatpush1.msra.mxu0 %v2070
        %2098 = vmatprep.subr.mxu0 0.0
        %2099 = vmatpush1.msra.mxu0 %v2071
        %2100 = vmatprep.subr.mxu0 0.0
        %2101 = vmatpush1.msra.mxu0 %v2072
        %2102 = vmatprep.subr.mxu0 0.0
        %2103 = vmatpush1.msra.mxu0 %v2073
        %2104 = vmatprep.subr.mxu0 0.0
        %2105 = vmatpush1.msra.mxu0 %v2074
        %2106 = vmatprep.subr.mxu0 0.0
        %2107 = vmatpush1.msra.mxu0 %v2075
        %2108 = vmatprep.subr.mxu0 0.0
        %2109 = vmatpush1.msra.mxu0 %v2082
        %2110 = vmatprep.subr.mxu0 0.0
        %2111 = vmatpush1.msra.mxu0 0.0
        %2112 = vmatprep.subr.mxu0 0.0
        %2113 = vmatpush1.msra.mxu0 0.0
        %2114 = vmatprep.subr.mxu0 0.0
        %2115 = vmatpush1.msra.mxu0 0.0
        %2116 = vmatprep.subr.mxu0 0.0
        %2117 = vmatpush1.msra.mxu0 0.0
        %2118 = vmatprep.subr.mxu0 0.0
        %2119 = vmatpush1.msra.mxu0 0.0
        %2120 = vmatprep.subr.mxu0 0.0
        %2121 = vmatpush1.msra.mxu0 0.0
        %2122 = vmatprep.subr.mxu0 0.0
        %2123 = vmatpush1.msra.mxu0 0.0
        %2124 = vmatprep.subr.mxu0 0.0
        %2125 = vmatpush1.msra.mxu0 0.0
        %2126 = vmatprep.subr.mxu0 0.0
        %2127 = vmatpush1.msra.mxu0 0.0
        %2128 = vmatprep.subr.mxu0 0.0
        %2129 = vmatpush1.msra.mxu0 0.0
        %2130 = vmatprep.subr.mxu0 0.0
        %2131 = vmatpush1.msra.mxu0 0.0
        %2132 = vmatprep.subr.mxu0 0.0
        %2133 = vmatpush1.msra.mxu0 0.0
        %2134 = vmatprep.subr.mxu0 0.0
        %2135 = vmatpush1.msra.mxu0 0.0
        %2136 = vmatprep.subr.mxu0 0.0
        %2137 = vmatpush1.msra.mxu0 0.0
        %2138 = vmatprep.subr.mxu0 0.0
        %2139 = vmatpush1.msra.mxu0 0.0
        %2140 = vmatprep.subr.mxu0 0.0
        %2141 = vmatpush1.msra.mxu0 0.0
        %2142 = vmatprep.subr.mxu0 0.0
        %2143 = vmatpush1.msra.mxu0 0.0
        %2144 = vmatprep.subr.mxu0 0.0
        %2145 = vmatpush1.msra.mxu0 0.0
        %2146 = vmatprep.subr.mxu0 0.0
        %2147 = vmatpush1.msra.mxu0 0.0
        %2148 = vmatprep.mubr.f32.mxu0 0.0
        %2149 = vmatmul.mubr.f32.gmra.mrb[0].mxu0 %v2079
        %v2150 = vpop.f32.mrb[0].mxu0
        %v2151 = vadd.f32 %v2077, %v2150
        %v2152 = vpop.f32.mrb[0].mxu0
        %2153 = vdwg.mxu0
        %vm2154 = vcmask 24576
        %2155 = vst.msk [vmem:[%s499] sm:$0x1] %vm2154, %v2151
        %s2156 = sand.u32 %s362, 1
        %s2157 = scalar_lea.sflag [#allocation3], %s2156
        %s2158 = sand.u32 %s362, 1
        %s2159 = scalar_lea.vmem [#allocation2], %s2158
        // Predicated region
        $region81: #{multinet_forward.1} parent=79 // pred_check
          %p2160 = pneg %p372
        $region82: #{multinet_forward.1} parent=79 // pred_check_branch
          %2162 = sbr.rel (%p2160) target = $region84
        $region83: #{multinet_forward.1} parent=79 // pred_region
          %s2164 = ssub.s32 16, 16
          %2165 = vsyncadd %s2157, %s2164
          %s2166 = smul.addr %s29, 16
          %s2167 = scalar_lea.hbm %s15, %s2166
          %s2169 = sshll.u32 %s2159, 4
          %s2170 = int_to_ptr.vmem [resolvable:$true] %s2169
          %2172 = dma.vmem_to_hbm [thread:$0]  %s2170, 16, %s2167, %s2157
        $region84: #{multinet_forward.1} parent=79 // pred_fallthru
          _
      $region80: #{multinet_forward.1} parent=5 // pred_fallthru
        _
      %p2173 = scmp.le.s32.totalorder 2, %s24
      // Predicated region
      $region85: #{multinet_forward.1} parent=5 // pred_check
        %p2174 = pneg %p2173
      $region86: #{multinet_forward.1} parent=5 // pred_check_branch
        %2176 = sbr.rel (%p2174) target = $region88
      $region87: #{multinet_forward.1} parent=5 // pred_region
        %s2177 = ssub.s32 %s24, 2
        // Predicated region
        $region89: #{multinet_forward.1} parent=87 // pred_check
          %p2178 = pneg %p378
        $region90: #{multinet_forward.1} parent=87 // pred_check_branch
          %2180 = sbr.rel (%p2178) target = $region92
        $region91: #{multinet_forward.1} parent=87 // pred_region
          %s2181 = sand.u32 %s363, 1
          %s2182 = scalar_lea.sflag [#allocation3], %s2181
          %s2183 = sand.u32 %s363, 1
          %s2184 = scalar_lea.vmem [#allocation2], %s2183
          %2185 = dma.done %s2182, 16
        $region92: #{multinet_forward.1} parent=87 // pred_fallthru
          _
      $region88: #{multinet_forward.1} parent=5 // pred_fallthru
        _
    $region6: #{multinet_forward.1} parent=1 // loop_footer
      %s28 = sadd.s32 1, %s24
    $region7: #{multinet_forward.1} parent=1 // loop_footer_branch
      %23 = sbr.rel target = $region3
    $region8: #{multinet_forward.1} parent=1 // loop_exit
      _
    %2186 = vsyncpa [#allocation3], 1
    %s2187 = scalar_lea.sflag [#allocation3], 1
    %2188 = vsyncpa %s2187, 1

</llo_original>
